<compile_context>
chip_gen: v6e
topology: v6e:2x2x1
jax: 0.10.0
libtpu: 0.0.40
codegen_flags: <defaults>
</compile_context>

<pallas_src>
import functools
import numpy as np

import jax
import jax.numpy as jnp
from jax.experimental import pallas as pl
from jax.experimental.pallas import tpu as pltpu

MXU_DTYPE = jnp.bfloat16          # storage dtype for the residual stream / matmul inputs


# ----------------------------------------------------------------------------- hw-aware budgets

def _vmem_capacity_bytes():
    try:
        return int(pltpu.get_tpu_info().vmem_capacity_bytes)
    except Exception:
        return 64 * 1024 * 1024   # conservative (v7x-sized) fallback


_VMEM_CAP = _vmem_capacity_bytes()
# ~48 MiB on 64 MiB parts (v7x), 64 MiB on 128 MiB parts (v5e/v6e).
_VMEM_LIMIT = int(min((_VMEM_CAP * 3) // 4, 64 * 1024 * 1024))
# attention window-group VMEM budget: tighter on v7x, looser where VMEM is plentiful.
_GW_BUDGET = 12 * (1 << 20) if _VMEM_CAP <= 64 * 1024 * 1024 else 20 * (1 << 20)


def _compiler_params(grid_rank):
    return pltpu.CompilerParams(
        dimension_semantics=("parallel",) * grid_rank,
        vmem_limit_bytes=_VMEM_LIMIT)


def _pick_rows(m, cap=2048):
    # Largest power-of-two row tile <= cap that divides m while keeping >=2 grid steps
    # (keeps both v7x TensorCores busy and amortizes the ~0.35us per-step overhead).
    t = cap
    while t >= 16:
        if m % t == 0 and m // t >= 2:
            return t
        t //= 2
    return 8 if (m % 8 == 0 and m // 8 >= 2) else m


def _pick_gw(n_windows, total_windows, per_window_bytes, budget):
    # Gw must divide nW (keeps the per-window bias index_map `g % nblk` exact, windows are
    # batch-major) and leave >=2 grid steps so both v7x TensorCores get work.
    g = n_windows
    while g > 1 and (n_windows % g or total_windows // g < 2
                     or g * per_window_bytes > budget):
        g -= 1
    return max(g, 1)


def _erf_f32(x):
    # Abramowitz-Stegun 7.1.26 rational approximation (|err| < 1.5e-7, i.e. f32-exact).
    a1, a2, a3, a4, a5 = 0.254829592, -0.284496736, 1.421413741, -1.453152027, 1.061405429
    pp = 0.3275911
    z = jnp.abs(x)
    t = 1.0 / (1.0 + pp * z)
    poly = t * (a1 + t * (a2 + t * (a3 + t * (a4 + t * a5))))
    y = 1.0 - poly * jnp.exp(-z * z)
    return jnp.where(x >= 0, y, -y)


def _gelu_f32(x):
    return 0.5 * x * (1.0 + _erf_f32(x * 0.7071067811865476))


# ----------------------------------------------------------------------------- kernels

def _ln_qkv_kernel(x_ref, g_ref, bt_ref, w_ref, wb_ref, o_ref):
    x = x_ref[...].astype(jnp.float32)
    mu = jnp.mean(x, axis=-1, keepdims=True)
    var = jnp.mean(jnp.square(x - mu), axis=-1, keepdims=True)
    xn = (x - mu) * jax.lax.rsqrt(var + 1e-5) * g_ref[...] + bt_ref[...]
    acc = jnp.dot(xn.astype(MXU_DTYPE), w_ref[...].astype(MXU_DTYPE),
                  preferred_element_type=jnp.float32) + wb_ref[...]
    # single merged, lane-dense output (q | kv); split happens in the wrapper.
    o_ref[...] = acc.astype(o_ref.dtype)


def _attn_kernel(qT_ref, k_ref, v_ref, bias_ref, res_ref, pw_ref, pb_ref, o_ref,
                 *, heads, scale):
    gw, _, hd, n = qT_ref.shape
    np_ = k_ref.shape[2]
    c = heads * hd
    gh = gw * heads

    qT = qT_ref[...].reshape(gh, hd, n)            # bf16, channels on sublanes, tokens on lanes
    k = k_ref[...].reshape(gh, np_, hd)            # bf16
    v = v_ref[...].reshape(gh, np_, hd)            # bf16

    # scores in the lane-dense (.., Np, N) layout: softmax elementwise work runs on N lanes.
    s = jnp.einsum('bpd,bdn->bpn', k, qT,
                   preferred_element_type=jnp.float32) * scale
    s = s.reshape(gw, heads, np_, n) + bias_ref[...]           # bias (1|Gw, heads, Np, N) f32
    m = jnp.max(s, axis=2, keepdims=True)
    e = jnp.exp(s - m)
    den = jnp.sum(e, axis=2, keepdims=True)
    # NOTE: approx reciprocal -> rows sum to ~1 (documented inference-tolerance deviation).
    p = e * pl.reciprocal(den, approx=True)

    # P.V as a standard batched matmul after one minor-dims transpose of P.
    p_nm = jnp.swapaxes(p.reshape(gh, np_, n), 1, 2).astype(MXU_DTYPE)   # (GH, N, Np)
    o = jnp.einsum('bnp,bpd->bnd', p_nm, v,
                   preferred_element_type=jnp.float32)                    # (GH, N, hd)

    # merge heads (cheap leading-axis slices + one lane concat) and do a SINGLE projection
    # matmul hoisted out of any head loop.
    o4 = o.reshape(gw, heads, n, hd)
    om = jnp.concatenate([o4[:, h] for h in range(heads)], axis=-1)       # (Gw, N, C)
    y = jnp.dot(om.reshape(gw * n, c).astype(MXU_DTYPE),
                pw_ref[...].astype(MXU_DTYPE),
                preferred_element_type=jnp.float32) + pb_ref[...]
    o_ref[...] = (res_ref[...].astype(jnp.float32) + y.reshape(gw, n, c)).astype(o_ref.dtype)


def _ffn_kernel(x_ref, g_ref, bt_ref, w1_ref, b1_ref, wd_ref, bd_ref, w2_ref, b2_ref,
                o_ref, hpad_ref, *, D, H, W, pad):
    R = D * H * W
    hid = w1_ref.shape[1]
    x = x_ref[0].astype(jnp.float32)                      # (R, C), residual kept live

    # LayerNorm2 + fc1 + exact-erf GELU
    mu = jnp.mean(x, axis=-1, keepdims=True)
    var = jnp.mean(jnp.square(x - mu), axis=-1, keepdims=True)
    xn = (x - mu) * jax.lax.rsqrt(var + 1e-5) * g_ref[...] + bt_ref[...]
    h = jnp.dot(xn.astype(MXU_DTYPE), w1_ref[...].astype(MXU_DTYPE),
                preferred_element_type=jnp.float32) + b1_ref[...]
    h = _gelu_f32(h)                                      # (R, hid) f32

    # depthwise 3x3x3 conv on the flattened (rows, hidden) layout.  The bf16 padded slab is
    # NOT zero-initialised: every out-of-volume tap is zeroed by the boundary mask below
    # before it is ever used, so the pad strips may hold garbage.
    hpad_ref[pad:pad + R, :] = h.astype(hpad_ref.dtype)

    r = jax.lax.broadcasted_iota(jnp.int32, (R, 1), 0)
    d_i = r // (H * W)
    h_i = (r // W) % H
    w_i = r % W
    wt = wd_ref[...].astype(jnp.float32)                  # (27, hid)

    acc = jnp.zeros((R, hid), jnp.float32)
    for kd in range(3):
        od = kd - 1
        dm = jnp.logical_and(d_i + od >= 0, d_i + od < D)
        for kh in range(3):
            oh = kh - 1
            hm = jnp.logical_and(h_i + oh >= 0, h_i + oh < H)
            dhm = jnp.logical_and(dm, hm)
            for kw in range(3):
                ow = kw - 1
                wm = jnp.logical_and(w_i + ow >= 0, w_i + ow < W)
                msk = jnp.logical_and(dhm, wm)
                off = pad + od * H * W + oh * W + ow
                tap = hpad_ref[off:off + R, :].astype(jnp.float32)
                kidx = (kd * 3 + kh) * 3 + kw
                acc = acc + jnp.where(msk, tap, 0.0) * wt[kidx:kidx + 1]
    d = _gelu_f32(acc + bd_ref[...].astype(jnp.float32))

    # (h + d) @ fc2 + bias + residual, all in the same grid step (no HBM round-trip of h/d).
    t = h + d
    y = jnp.dot(t.astype(MXU_DTYPE), w2_ref[...].astype(MXU_DTYPE),
                preferred_element_type=jnp.float32) + b2_ref[...]
    o_ref[0] = (x + y).astype(o_ref.dtype)


# ----------------------------------------------------------------------------- wrappers

def ln_qkv(x2d, gamma, beta, w, b):
    M, C = x2d.shape
    ntot = w.shape[1]
    tm = _pick_rows(M)
    return pl.pallas_call(
        _ln_qkv_kernel,
        out_shape=jax.ShapeDtypeStruct((M, ntot), MXU_DTYPE),
        grid=(M // tm,),
        in_specs=[pl.BlockSpec((tm, C), lambda i: (i, 0)),
                  pl.BlockSpec((1, C), lambda i: (0, 0)),
                  pl.BlockSpec((1, C), lambda i: (0, 0)),
                  pl.BlockSpec((C, ntot), lambda i: (0, 0)),
                  pl.BlockSpec((1, ntot), lambda i: (0, 0))],
        out_specs=pl.BlockSpec((tm, ntot), lambda i: (i, 0)),
        compiler_params=_compiler_params(1),
    )(x2d, gamma.reshape(1, C), beta.reshape(1, C), w, b.reshape(1, ntot))


def attn_fused(qT, k, v, attn_bias, res, proj_w, proj_b, *, heads, scale, nW, shifted):
    B_, _, hd, N = qT.shape
    Np = k.shape[2]
    C = heads * hd
    # per-window VMEM estimate incl. double buffering of the streamed blocks + in-kernel
    # f32 temporaries (scores/probs, per-head outputs, merged/proj buffers).
    per_win = (2 * 2 * (heads * hd * N + 2 * heads * Np * hd + 2 * N * C)   # bf16 q,k,v,res,out x dbuf
               + 2 * heads * Np * N * 4                                     # bias f32 x dbuf
               + 4 * heads * Np * N * 4 + heads * N * hd * 4 + 2 * N * C * 4)
    Gw = _pick_gw(nW, B_, per_win, _GW_BUDGET)
    nblk = max(nW // Gw, 1)

    if shifted:
        bias_spec = pl.BlockSpec((Gw, heads, Np, N), lambda g: (g % nblk, 0, 0, 0))
    else:
        # shared (1, heads, Np, N) bias: no nW-fold HBM broadcast is ever materialized.
        bias_spec = pl.BlockSpec((1, heads, Np, N), lambda g: (0, 0, 0, 0))

    kern = functools.partial(_attn_kernel, heads=heads, scale=scale)
    return pl.pallas_call(
        kern,
        out_shape=jax.ShapeDtypeStruct((B_, N, C), MXU_DTYPE),
        grid=(B_ // Gw,),
        in_specs=[pl.BlockSpec((Gw, heads, hd, N), lambda g: (g, 0, 0, 0)),
                  pl.BlockSpec((Gw, heads, Np, hd), lambda g: (g, 0, 0, 0)),
                  pl.BlockSpec((Gw, heads, Np, hd), lambda g: (g, 0, 0, 0)),
                  bias_spec,
                  pl.BlockSpec((Gw, N, C), lambda g: (g, 0, 0)),
                  pl.BlockSpec((C, C), lambda g: (0, 0)),
                  pl.BlockSpec((1, C), lambda g: (0, 0))],
        out_specs=pl.BlockSpec((Gw, N, C), lambda g: (g, 0, 0)),
        compiler_params=_compiler_params(1),
    )(qT, k, v, attn_bias, res, proj_w, proj_b.reshape(1, C))


def ffn_fused(x3d, gamma, beta, w1, b1, wd, bd, w2, b2, D, H, W):
    B, L, C = x3d.shape
    hid = w1.shape[1]
    pad = ((H * W + W + 1 + 7) // 8) * 8
    kern = functools.partial(_ffn_kernel, D=D, H=H, W=W, pad=pad)
    return pl.pallas_call(
        kern,
        out_shape=jax.ShapeDtypeStruct((B, L, C), MXU_DTYPE),
        grid=(B,),
        in_specs=[pl.BlockSpec((1, L, C), lambda b: (b, 0, 0)),
                  pl.BlockSpec((1, C), lambda b: (0, 0)),
                  pl.BlockSpec((1, C), lambda b: (0, 0)),
                  pl.BlockSpec((C, hid), lambda b: (0, 0)),
                  pl.BlockSpec((1, hid), lambda b: (0, 0)),
                  pl.BlockSpec((27, hid), lambda b: (0, 0)),
                  pl.BlockSpec((1, hid), lambda b: (0, 0)),
                  pl.BlockSpec((hid, C), lambda b: (0, 0)),
                  pl.BlockSpec((1, C), lambda b: (0, 0))],
        out_specs=pl.BlockSpec((1, L, C), lambda b: (b, 0, 0)),
        scratch_shapes=[pltpu.VMEM((L + 2 * pad, hid), MXU_DTYPE)],
        compiler_params=_compiler_params(1),
    )(x3d, gamma.reshape(1, C), beta.reshape(1, C), w1, b1.reshape(1, hid),
      wd.reshape(27, hid), bd.reshape(1, hid), w2, b2.reshape(1, C))


# ----------------------------------------------------------------------------- glue (windows, masks, indices)

def window_partition3d(x, ws):
    B, D, H, W, C = x.shape
    x = x.reshape(B, D // ws[0], ws[0], H // ws[1], ws[1], W // ws[2], ws[2], C)
    return x.transpose(0, 1, 3, 5, 2, 4, 6, 7).reshape(-1, ws[0], ws[1], ws[2], C)


def window_reverse3d(win, ws, D, H, W):
    B = win.shape[0] // (D * H * W // (ws[0] * ws[1] * ws[2]))
    x = win.reshape(B, D // ws[0], H // ws[1], W // ws[2], ws[0], ws[1], ws[2], -1)
    return x.transpose(0, 1, 4, 2, 5, 3, 6, 7).reshape(B, D, H, W, -1)


def _window_partition_np(x, ws):
    B, D, H, W, C = x.shape
    x = x.reshape(B, D // ws[0], ws[0], H // ws[1], ws[1], W // ws[2], ws[2], C)
    return x.transpose(0, 1, 3, 5, 2, 4, 6, 7).reshape(-1, ws[0], ws[1], ws[2], C)


def _calculate_mask_np(x_size, ws, ss):
    D, H, W = x_size
    img_mask = np.zeros((1, D, H, W, 1), np.float32)
    d_sl = (slice(0, -ws[0]), slice(-ws[0], -ss[0]), slice(-ss[0], None))
    h_sl = (slice(0, -ws[1]), slice(-ws[1], -ss[1]), slice(-ss[1], None))
    w_sl = (slice(0, -ws[2]), slice(-ws[2], -ss[2]), slice(-ss[2], None))
    cnt = 0
    for d in d_sl:
        for h in h_sl:
            for w in w_sl:
                img_mask[:, d, h, w, :] = cnt
                cnt += 1
    mask_windows = _window_partition_np(img_mask, ws).reshape(-1, ws[0] * ws[1] * ws[2])

    pws = [w // 2 for w in ws]
    pmask = np.zeros((1, D // 2, H // 2, W // 2, 1), np.float32)
    d_sl = (slice(0, -pws[0]), slice(-pws[0], -ss[0] // 2), slice(-ss[0] // 2, None))
    h_sl = (slice(0, -pws[1]), slice(-pws[1], -ss[1] // 2), slice(-ss[1] // 2, None))
    w_sl = (slice(0, -pws[2]), slice(-pws[2], -ss[2] // 2), slice(-ss[2] // 2, None))
    cnt = 0
    for d in d_sl:
        for h in h_sl:
            for w in w_sl:
                pmask[:, d, h, w, :] = cnt
                cnt += 1
    permuted_windows = _window_partition_np(pmask, pws).reshape(-1, pws[0] * pws[1] * pws[2])

    attn_mask = mask_windows[:, :, None] - permuted_windows[:, None, :]
    attn_mask = np.where(attn_mask != 0, -100.0, 0.0).astype(np.float32)
    return attn_mask                                        # (nW, N, Np)


def _aligned_relative_position_index_np(ws):
    pws = [w // 2 for w in ws]
    coords = np.stack(np.meshgrid(np.arange(pws[0]), np.arange(pws[1]),
                                  np.arange(pws[2]), indexing="ij"))
    cf = coords.reshape(3, -1)
    rel = (cf[:, :, None] - cf[:, None, :]).transpose(1, 2, 0).astype(np.int64)
    rel[:, :, 0] += pws[0] - 1
    rel[:, :, 1] += pws[1] - 1
    rel[:, :, 2] += pws[2] - 1
    rel[:, :, 0] *= (2 * pws[1] - 1) * (2 * pws[2] - 1)
    rel[:, :, 1] *= (2 * pws[2] - 1)
    rpi = rel.sum(-1)                                       # (Np, Np)
    Np = pws[0] * pws[1] * pws[2]
    rpi = rpi.reshape(pws[0], pws[1], pws[2], 1, 1, 1, Np)
    rpi = np.tile(rpi, (1, 1, 1, 2, 2, 2, 1))
    rpi = rpi.transpose(0, 3, 1, 4, 2, 5, 6).reshape(8 * Np, Np)
    return rpi                                              # (N, Np)


# ----------------------------------------------------------------------------- block / layer

def psa_block_forward(x, x_size, p, cfg):
    D, H, W = x_size
    B, L, C = x.shape
    ws, ss = cfg["window_size"], cfg["shift_size"]
    heads = cfg["num_heads"]
    nW = cfg["nW"]
    shifted = cfg["shifted"]
    pws = [w // 2 for w in ws]
    N = ws[0] * ws[1] * ws[2]
    Np = pws[0] * pws[1] * pws[2]
    hd = C // heads
    hd8 = C // (heads * 8)
    scale = hd ** -0.5

    x = x.astype(MXU_DTYPE)                                 # bf16 residual stream

    # --- PSA attention: LN1 + merged q/kv proj, windowed attention + proj + residual ---
    xs = x.reshape(B, D, H, W, C)
    if shifted:
        xs = jnp.roll(xs, shift=(-ss[0], -ss[1], -ss[2]), axis=(1, 2, 3))
    xw = window_partition3d(xs, ws).reshape(-1, N, C)       # (B_, N, C) pre-norm (residual)
    B_ = xw.shape[0]

    qkv = ln_qkv(xw.reshape(B_ * N, C), p["norm1_g"], p["norm1_b"],
                 p["qkv_w"], p["qkv_b"])                    # (M, C + C//4) bf16, merged
    q2d = qkv[:, :C]
    kv2d = qkv[:, C:]

    # heads split once in the wrapper; q stored channels-on-sublanes / tokens-on-lanes.
    qT = q2d.reshape(B_, N, heads, hd).transpose(0, 2, 3, 1)          # (B_, heads, hd, N)
    # permuted-KV rearrangement on the compressed tensor only (tiny XLA glue).
    kvt = kv2d.reshape(B_, pws[0], 2, pws[1], 2, pws[2], 2, 2, heads, hd8)
    kvt = kvt.transpose(0, 7, 8, 1, 3, 5, 2, 4, 6, 9).reshape(B_, 2, heads, Np, hd)
    k = kvt[:, 0]
    v = kvt[:, 1]

    out_win = attn_fused(qT, k, v, p["attn_bias"], xw, p["proj_w"], p["proj_b"],
                         heads=heads, scale=scale, nW=nW, shifted=shifted)
    xr = window_reverse3d(out_win.reshape(-1, ws[0], ws[1], ws[2], C), ws, D, H, W)
    if shifted:
        xr = jnp.roll(xr, shift=(ss[0], ss[1], ss[2]), axis=(1, 2, 3))
    x = xr.reshape(B, L, C)

    # --- ConvFFN3D: fully fused (LN2+fc1+GELU -> dwconv+GELU -> (h+d)+fc2+residual) ---
    x = ffn_fused(x, p["norm2_g"], p["norm2_b"], p["fc1_w"], p["fc1_b"],
                  p["dw_w"], p["dw_b"], p["fc2_w"], p["fc2_b"], D, H, W)
    return x


def basic_layer3d_forward(x, x_size, blocks):
    for (p, cfg) in blocks:
        x = psa_block_forward(x, x_size, p, cfg)
    return x   # downsample=None


# ----------------------------------------------------------------------------- init

def init_block_params(key, dim, num_heads, ws, hidden):
    pws = [w // 2 for w in ws]
    N = ws[0] * ws[1] * ws[2]
    Np = pws[0] * pws[1] * pws[2]
    tbl = (2 * pws[0] - 1) * (2 * pws[1] - 1) * (2 * pws[2] - 1)
    ks = jax.random.split(key, 12)

    def w_init(k, shape, scale=0.02):
        return (scale * jax.random.normal(k, shape)).astype(jnp.float32)

    q_w = w_init(ks[3], (dim, dim))
    q_b = w_init(ks[4], (dim,), 0.01)
    # TODO(synk): reference PSA3D declares nn.Linear(dim, dim//2) but its reshape is
    # shape-inconsistent (would raise in PyTorch); dim//4 is the consistent 3D
    # generalization of SRFormer's permuted-KV compression and is used here.
    kv_w = w_init(ks[1], (dim, dim // 4))
    kv_b = w_init(ks[2], (dim // 4,), 0.01)

    p = {
        "norm1_g": jnp.ones((dim,), jnp.float32), "norm1_b": jnp.zeros((dim,), jnp.float32),
        "norm2_g": jnp.ones((dim,), jnp.float32), "norm2_b": jnp.zeros((dim,), jnp.float32),
        "qkv_w": jnp.concatenate([q_w, kv_w], axis=1),      # merged q | kv projection
        "qkv_b": jnp.concatenate([q_b, kv_b], axis=0),
        "proj_w": w_init(ks[5], (dim, dim)), "proj_b": jnp.zeros((dim,), jnp.float32),
        "fc1_w": w_init(ks[6], (dim, hidden)), "fc1_b": w_init(ks[7], (hidden,), 0.01),
        "dw_w": w_init(ks[8], (3, 3, 3, hidden)), "dw_b": w_init(ks[9], (hidden,), 0.01),
        "fc2_w": w_init(ks[10], (hidden, dim)), "fc2_b": jnp.zeros((dim,), jnp.float32),
    }
    rpb_table = w_init(ks[0], (tbl, num_heads))             # trunc_normal_(std=0.02)-like
    rpi = _aligned_relative_position_index_np(ws)           # (N, Np)
    rel = rpb_table[rpi.reshape(-1)].reshape(N, Np, num_heads).transpose(2, 0, 1)
    p["rel_bias_t"] = rel.transpose(0, 2, 1)                # (heads, Np, N) lane-dense layout
    return p


def build_basic_layer3d(key, dim, input_resolution, depth, num_heads, window_size, mlp_ratio):
    hidden = int(dim * mlp_ratio)
    Dr, Hr, Wr = input_resolution
    blocks = []
    keys = jax.random.split(key, depth)
    for i in range(depth):
        ws = list(window_size)
        ss = [0, 0, 0] if i % 2 == 0 else [w // 2 for w in window_size]
        if min(input_resolution) <= min(ws):
            ss = [0, 0, 0]
            ws = [min(input_resolution)] * 3
        nW = (Dr // ws[0]) * (Hr // ws[1]) * (Wr // ws[2])
        shifted = any(s > 0 for s in ss)
        p = init_block_params(keys[i], dim, num_heads, ws, hidden)
        # Precompute the per-window attention bias in the lane-dense (heads, Np, N) layout.
        # Non-shifted blocks keep a single shared (1, heads, Np, N) copy (no nW broadcast).
        if shifted:
            mask_t = jnp.asarray(
                _calculate_mask_np(input_resolution, ws, ss)).transpose(0, 2, 1)
            attn_bias = p["rel_bias_t"][None] + mask_t[:, None]          # (nW, heads, Np, N)
        else:
            attn_bias = p["rel_bias_t"][None]                            # (1, heads, Np, N)
        p["attn_bias"] = jnp.asarray(attn_bias, jnp.float32)
        cfg = {"window_size": ws, "shift_size": ss, "num_heads": num_heads,
               "nW": nW, "shifted": shifted}
        blocks.append((p, cfg))
    return blocks


# ----------------------------------------------------------------------------- main

if __name__ == "__main__":
    dim = 32
    num_heads = 4
    window_size = (4, 4, 4)
    input_resolution = (8, 8, 8)
    depth = 2                     # block 0: no shift, block 1: shifted windows (masked)
    mlp_ratio = 2.0
    B = 2
    D, H, W = input_resolution
    L = D * H * W

    key = jax.random.PRNGKey(0)
    kx, kp = jax.random.split(key)
    x = jax.random.normal(kx, (B, L, dim), jnp.float32)

    blocks = build_basic_layer3d(kp, dim, input_resolution, depth, num_heads,
                                 window_size, mlp_ratio)
    out = basic_layer3d_forward(x, input_resolution, blocks)
    out = jax.block_until_ready(out)
    assert out.shape == (B, L, dim)
    assert bool(jnp.all(jnp.isfinite(out.astype(jnp.float32))))
    print("KERNEL_OK")
</pallas_src>

<mosaic_0001>
module attributes {stable_mosaic.version = 11 : i64} {
  func.func @_ln_qkv_kernel(%arg0: i32, %arg1: memref<512x32xbf16, #tpu.memory_space<vmem>>, %arg2: memref<1x32xf32, #tpu.memory_space<vmem>>, %arg3: memref<1x32xf32, #tpu.memory_space<vmem>>, %arg4: memref<32x40xf32, #tpu.memory_space<vmem>>, %arg5: memref<1x40xf32, #tpu.memory_space<vmem>>, %arg6: memref<512x40xbf16, #tpu.memory_space<vmem>>) attributes {dimension_semantics = [#tpu.dimension_semantics<parallel>], iteration_bounds = array<i64: 2>, scalar_prefetch = 0 : i64, scratch_operands = 0 : i64, tpu.core_type = #tpu.core_type<tc>, window_params = [{transform_indices = @transform_0, window_bounds = array<i64: 512, 32>}, {pipeline_mode = #tpu.pipeline_mode<synchronous>, transform_indices = @transform_1, window_bounds = array<i64: 1, 32>}, {pipeline_mode = #tpu.pipeline_mode<synchronous>, transform_indices = @transform_2, window_bounds = array<i64: 1, 32>}, {pipeline_mode = #tpu.pipeline_mode<synchronous>, transform_indices = @transform_3, window_bounds = array<i64: 32, 40>}, {pipeline_mode = #tpu.pipeline_mode<synchronous>, transform_indices = @transform_4, window_bounds = array<i64: 1, 40>}, {transform_indices = @transform_5, window_bounds = array<i64: 512, 40>}]} {
    %c0 = arith.constant 0 : index
    %c0_0 = arith.constant 0 : index
    %0 = vector.load %arg1[%c0, %c0_0] : memref<512x32xbf16, #tpu.memory_space<vmem>>, vector<512x32xbf16>
    %1 = arith.extf %0 : vector<512x32xbf16> to vector<512x32xf32>
    %cst = arith.constant dense<0.000000e+00> : vector<512xf32>
    %2 = vector.multi_reduction <add>, %1, %cst [1] : vector<512x32xf32> to vector<512xf32>
    %3 = vector.shape_cast %2 : vector<512xf32> to vector<512x1xf32>
    %cst_1 = arith.constant 3.200000e+01 : f32
    %4 = vector.broadcast %cst_1 : f32 to vector<512x1xf32>
    %5 = arith.divf %3, %4 : vector<512x1xf32>
    %6 = vector.broadcast %5 : vector<512x1xf32> to vector<512x32xf32>
    %7 = arith.subf %1, %6 : vector<512x32xf32>
    %8 = arith.mulf %7, %7 : vector<512x32xf32>
    %cst_2 = arith.constant dense<0.000000e+00> : vector<512xf32>
    %9 = vector.multi_reduction <add>, %8, %cst_2 [1] : vector<512x32xf32> to vector<512xf32>
    %10 = vector.shape_cast %9 : vector<512xf32> to vector<512x1xf32>
    %cst_3 = arith.constant 3.200000e+01 : f32
    %11 = vector.broadcast %cst_3 : f32 to vector<512x1xf32>
    %12 = arith.divf %10, %11 : vector<512x1xf32>
    %13 = vector.broadcast %5 : vector<512x1xf32> to vector<512x32xf32>
    %14 = arith.subf %1, %13 : vector<512x32xf32>
    %cst_4 = arith.constant 9.99999974E-6 : f32
    %15 = vector.broadcast %cst_4 : f32 to vector<512x1xf32>
    %16 = arith.addf %12, %15 : vector<512x1xf32>
    %17 = math.rsqrt %16 : vector<512x1xf32>
    %18 = vector.broadcast %17 : vector<512x1xf32> to vector<512x32xf32>
    %19 = arith.mulf %14, %18 : vector<512x32xf32>
    %c0_5 = arith.constant 0 : index
    %c0_6 = arith.constant 0 : index
    %20 = vector.load %arg2[%c0_5, %c0_6] : memref<1x32xf32, #tpu.memory_space<vmem>>, vector<1x32xf32>
    %21 = vector.broadcast %20 : vector<1x32xf32> to vector<512x32xf32>
    %22 = arith.mulf %19, %21 : vector<512x32xf32>
    %c0_7 = arith.constant 0 : index
    %c0_8 = arith.constant 0 : index
    %23 = vector.load %arg3[%c0_7, %c0_8] : memref<1x32xf32, #tpu.memory_space<vmem>>, vector<1x32xf32>
    %24 = vector.broadcast %23 : vector<1x32xf32> to vector<512x32xf32>
    %25 = arith.addf %22, %24 : vector<512x32xf32>
    %26 = arith.truncf %25 : vector<512x32xf32> to vector<512x32xbf16>
    %c0_9 = arith.constant 0 : index
    %c0_10 = arith.constant 0 : index
    %27 = vector.load %arg4[%c0_9, %c0_10] : memref<32x40xf32, #tpu.memory_space<vmem>>, vector<32x40xf32>
    %28 = arith.truncf %27 : vector<32x40xf32> to vector<32x40xbf16>
    %cst_11 = arith.constant dense<0.000000e+00> : vector<512x40xf32>
    %29 = tpu.matmul %26, %28, %cst_11 {dimension_numbers = #tpu.dot_dimension_numbers<[1], [0], [0], [1], [0, 0, 1, 1], [], []>} : vector<512x32xbf16>, vector<32x40xbf16>, vector<512x40xf32> -> vector<512x40xf32>
    %c0_12 = arith.constant 0 : index
    %c0_13 = arith.constant 0 : index
    %30 = vector.load %arg5[%c0_12, %c0_13] : memref<1x40xf32, #tpu.memory_space<vmem>>, vector<1x40xf32>
    %31 = vector.broadcast %30 : vector<1x40xf32> to vector<512x40xf32>
    %32 = arith.addf %29, %31 : vector<512x40xf32>
    %33 = arith.truncf %32 : vector<512x40xf32> to vector<512x40xbf16>
    %c0_14 = arith.constant 0 : index
    %c0_15 = arith.constant 0 : index
    %34 = vector.load %arg6[%c0_14, %c0_15] : memref<512x40xbf16, #tpu.memory_space<vmem>>, vector<512x40xbf16>
    tpu.vector_store %arg6[%c0_14, %c0_15], %33 {strides = array<i32>} : memref<512x40xbf16, #tpu.memory_space<vmem>>, vector<512x40xbf16>,
    return
  }
  func.func @transform_0(%arg0: i32) -> (i32, i32) {
    %c0_i32 = arith.constant 0 : i32
    %c0_i32_0 = arith.constant 0 : i32
    return %arg0, %c0_i32 : i32, i32
  }
  func.func @transform_1(%arg0: i32) -> (i32, i32) {
    %c0_i32 = arith.constant 0 : i32
    %c0_i32_0 = arith.constant 0 : i32
    %c0_i32_1 = arith.constant 0 : i32
    return %c0_i32, %c0_i32_0 : i32, i32
  }
  func.func @transform_2(%arg0: i32) -> (i32, i32) {
    %c0_i32 = arith.constant 0 : i32
    %c0_i32_0 = arith.constant 0 : i32
    %c0_i32_1 = arith.constant 0 : i32
    return %c0_i32, %c0_i32_0 : i32, i32
  }
  func.func @transform_3(%arg0: i32) -> (i32, i32) {
    %c0_i32 = arith.constant 0 : i32
    %c0_i32_0 = arith.constant 0 : i32
    %c0_i32_1 = arith.constant 0 : i32
    return %c0_i32, %c0_i32_0 : i32, i32
  }
  func.func @transform_4(%arg0: i32) -> (i32, i32) {
    %c0_i32 = arith.constant 0 : i32
    %c0_i32_0 = arith.constant 0 : i32
    %c0_i32_1 = arith.constant 0 : i32
    return %c0_i32, %c0_i32_0 : i32, i32
  }
  func.func @transform_5(%arg0: i32) -> (i32, i32) {
    %c0_i32 = arith.constant 0 : i32
    %c0_i32_0 = arith.constant 0 : i32
    return %arg0, %c0_i32 : i32, i32
  }
}

</mosaic_0001>

<llo_original>
// kernel: tpu_custom_call.1
$region0: #{tpu_custom_call.1}
  #allocation0 [shape = 'u32[]', space=smem, size = 0x4, offset = 0x4, fixed_abs, tag = 'smem constant byte address 0x4 - core index']
  #allocation1 [shape = 'u32[144,128]{1,0:T(1,128)}', space=vmem, size = 0x12000, scoped, tag = 'internal scratch']
  %s0 = inlined_call_operand.vmem [shape: bf16[1024,32], index: 0, kind: input, shape index: {}]
  %s1 = inlined_call_operand.vmem [shape: f32[1,32], index: 1, kind: input, shape index: {}]
  %s2 = inlined_call_operand.vmem [shape: f32[1,32], index: 2, kind: input, shape index: {}]
  %s3 = inlined_call_operand.vmem [shape: f32[32,40], index: 3, kind: input, shape index: {}]
  %s4 = inlined_call_operand.vmem [shape: f32[1,40], index: 4, kind: input, shape index: {}]
  %s5 = inlined_call_operand.vmem [shape: bf16[1024,40], index: 5, kind: output, shape index: {}]
  %s6 = sld [smem:[#allocation0]]
  $region53: #{tpu_custom_call.1} parent=0
    _
  %s8 = ssub.s32 1, %s6
  %s9 = scalar_select 0, %s8, %s6
  loop: start=0, step=1, limit=4
  $region2: #{tpu_custom_call.1} parent=0 // loop_pre_header
    _
  $region3: #{tpu_custom_call.1} parent=0 // loop_header
    %s11 = sphi 0, %s15
    %p12 = scmp.ge.s32.totalorder %s11, 4
    %s21 = sphi 0, %s23
    %s24 = sphi 0, %s21
    %s25 = sphi 0, %s24
    %s41 = sphi 0, %s25
    %s45 = sphi 0, %s45
    %s47 = sphi 0, %s45
    %s48 = sphi 0, %s47
    %s62 = sphi 0, %s48
    %s66 = sphi 0, %s66
    %s68 = sphi 0, %s66
    %s69 = sphi 0, %s68
    %s83 = sphi 0, %s69
    %s87 = sphi 0, %s87
    %s89 = sphi 0, %s87
    %s90 = sphi 0, %s89
    %s104 = sphi 0, %s90
    %s108 = sphi 0, %s108
    %s110 = sphi 0, %s108
    %s111 = sphi 0, %s110
    %s125 = sphi 0, %s111
    %s131 = sphi 0, %s133
    %s134 = sphi 0, %s131
    %s135 = sphi 0, %s134
    %s151 = sphi 0, %s135
  $region4: #{tpu_custom_call.1} parent=0 // loop_header_branch
    %14 = sbr.rel (%p12) target = $region8
  $region5: #{tpu_custom_call.1} parent=0 // loop_body
    %s16 = ssub.s32 %s11, 1
    %s17 = ssub.s32 %s11, 2
    %s18 = sadd.s32 %s11, 1
    %s19 = ssub.s32 %s11, %s18
    %p20 = scmp.eq.s32.totalorder %s19, 0
    %s22 = sadd.s32 %s21, 1
    %s23 = scalar_select %p20, %s21, %s22
    %p26 = pneg %p20
    %p27 = scmp.eq.s32.totalorder %s11, 1
    %p28 = por %p26, %p27
    %p29 = scmp.ne.s32.totalorder %s21, %s24
    %p30 = scmp.eq.s32.totalorder %s11, 0
    %p31 = por %p29, %p30
    %p32 = scmp.ne.s32.totalorder %s21, %s24
    %p33 = scmp.eq.s32.totalorder %s16, 1
    %p34 = por %p32, %p33
    %p35 = scmp.ne.s32.totalorder %s24, %s25
    %p36 = scmp.eq.s32.totalorder %s16, 0
    %p37 = por %p35, %p36
    %p38 = scmp.ne.s32.totalorder %s24, %s25
    %p39 = scmp.eq.s32.totalorder %s17, 1
    %p40 = por %p38, %p39
    %p42 = scmp.ne.s32.totalorder %s25, %s41
    %p43 = scmp.eq.s32.totalorder %s17, 0
    %p44 = por %p42, %p43
    %s46 = sadd.s32 %s45, 1
    %p49 = scmp.eq.s32.totalorder %s11, 1
    %p50 = scmp.ne.s32.totalorder %s45, %s47
    %p51 = scmp.eq.s32.totalorder %s11, 0
    %p52 = por %p50, %p51
    %p53 = scmp.ne.s32.totalorder %s45, %s47
    %p54 = scmp.eq.s32.totalorder %s16, 1
    %p55 = por %p53, %p54
    %p56 = scmp.ne.s32.totalorder %s47, %s48
    %p57 = scmp.eq.s32.totalorder %s16, 0
    %p58 = por %p56, %p57
    %p59 = scmp.ne.s32.totalorder %s47, %s48
    %p60 = scmp.eq.s32.totalorder %s17, 1
    %p61 = por %p59, %p60
    %p63 = scmp.ne.s32.totalorder %s48, %s62
    %p64 = scmp.eq.s32.totalorder %s17, 0
    %p65 = por %p63, %p64
    %s67 = sadd.s32 %s66, 1
    %p70 = scmp.eq.s32.totalorder %s11, 1
    %p71 = scmp.ne.s32.totalorder %s66, %s68
    %p72 = scmp.eq.s32.totalorder %s11, 0
    %p73 = por %p71, %p72
    %p74 = scmp.ne.s32.totalorder %s66, %s68
    %p75 = scmp.eq.s32.totalorder %s16, 1
    %p76 = por %p74, %p75
    %p77 = scmp.ne.s32.totalorder %s68, %s69
    %p78 = scmp.eq.s32.totalorder %s16, 0
    %p79 = por %p77, %p78
    %p80 = scmp.ne.s32.totalorder %s68, %s69
    %p81 = scmp.eq.s32.totalorder %s17, 1
    %p82 = por %p80, %p81
    %p84 = scmp.ne.s32.totalorder %s69, %s83
    %p85 = scmp.eq.s32.totalorder %s17, 0
    %p86 = por %p84, %p85
    %s88 = sadd.s32 %s87, 1
    %p91 = scmp.eq.s32.totalorder %s11, 1
    %p92 = scmp.ne.s32.totalorder %s87, %s89
    %p93 = scmp.eq.s32.totalorder %s11, 0
    %p94 = por %p92, %p93
    %p95 = scmp.ne.s32.totalorder %s87, %s89
    %p96 = scmp.eq.s32.totalorder %s16, 1
    %p97 = por %p95, %p96
    %p98 = scmp.ne.s32.totalorder %s89, %s90
    %p99 = scmp.eq.s32.totalorder %s16, 0
    %p100 = por %p98, %p99
    %p101 = scmp.ne.s32.totalorder %s89, %s90
    %p102 = scmp.eq.s32.totalorder %s17, 1
    %p103 = por %p101, %p102
    %p105 = scmp.ne.s32.totalorder %s90, %s104
    %p106 = scmp.eq.s32.totalorder %s17, 0
    %p107 = por %p105, %p106
    %s109 = sadd.s32 %s108, 1
    %p112 = scmp.eq.s32.totalorder %s11, 1
    %p113 = scmp.ne.s32.totalorder %s108, %s110
    %p114 = scmp.eq.s32.totalorder %s11, 0
    %p115 = por %p113, %p114
    %p116 = scmp.ne.s32.totalorder %s108, %s110
    %p117 = scmp.eq.s32.totalorder %s16, 1
    %p118 = por %p116, %p117
    %p119 = scmp.ne.s32.totalorder %s110, %s111
    %p120 = scmp.eq.s32.totalorder %s16, 0
    %p121 = por %p119, %p120
    %p122 = scmp.ne.s32.totalorder %s110, %s111
    %p123 = scmp.eq.s32.totalorder %s17, 1
    %p124 = por %p122, %p123
    %p126 = scmp.ne.s32.totalorder %s111, %s125
    %p127 = scmp.eq.s32.totalorder %s17, 0
    %p128 = por %p126, %p127
    %s129 = ssub.s32 %s11, %s18
    %p130 = scmp.eq.s32.totalorder %s129, 0
    %s132 = sadd.s32 %s131, 1
    %s133 = scalar_select %p130, %s131, %s132
    %p136 = pneg %p130
    %p137 = scmp.eq.s32.totalorder %s11, 1
    %p138 = por %p136, %p137
    %p139 = scmp.ne.s32.totalorder %s131, %s134
    %p140 = scmp.eq.s32.totalorder %s11, 0
    %p141 = por %p139, %p140
    %p142 = scmp.ne.s32.totalorder %s131, %s134
    %p143 = scmp.eq.s32.totalorder %s16, 1
    %p144 = por %p142, %p143
    %p145 = scmp.ne.s32.totalorder %s134, %s135
    %p146 = scmp.eq.s32.totalorder %s16, 0
    %p147 = por %p145, %p146
    %p148 = scmp.ne.s32.totalorder %s134, %s135
    %p149 = scmp.eq.s32.totalorder %s17, 1
    %p150 = por %p148, %p149
    %p152 = scmp.ne.s32.totalorder %s135, %s151
    %p153 = scmp.eq.s32.totalorder %s17, 0
    %p154 = por %p152, %p153
    %p155 = scmp.le.s32.totalorder 1, %s11
    %p156 = scmp.lt.s32.totalorder %s11, 3
    %p157 = pnand %p155, %p156
    %p158 = pneg %p157
    // Predicated region
    $region9: #{tpu_custom_call.1} parent=5 // pred_check
      _
    $region10: #{tpu_custom_call.1} parent=5 // pred_check_branch
      %160 = sbr.rel (%p157) target = $region12
    $region11: #{tpu_custom_call.1} parent=5 // pred_region
      %s161 = ssub.s32 %s11, 1
      // Predicated region
      $region13: #{tpu_custom_call.1} parent=11 // pred_check
        %p162 = pneg %p58
      $region14: #{tpu_custom_call.1} parent=11 // pred_check_branch
        %164 = sbr.rel (%p162) target = $region16
      $region15: #{tpu_custom_call.1} parent=11 // pred_region
        _
      $region16: #{tpu_custom_call.1} parent=11 // pred_fallthru
        _
      // Predicated region
      $region17: #{tpu_custom_call.1} parent=11 // pred_check
        %p165 = pneg %p79
      $region18: #{tpu_custom_call.1} parent=11 // pred_check_branch
        %167 = sbr.rel (%p165) target = $region20
      $region19: #{tpu_custom_call.1} parent=11 // pred_region
        _
      $region20: #{tpu_custom_call.1} parent=11 // pred_fallthru
        _
      // Predicated region
      $region21: #{tpu_custom_call.1} parent=11 // pred_check
        %p168 = pneg %p100
      $region22: #{tpu_custom_call.1} parent=11 // pred_check_branch
        %170 = sbr.rel (%p168) target = $region24
      $region23: #{tpu_custom_call.1} parent=11 // pred_region
        _
      $region24: #{tpu_custom_call.1} parent=11 // pred_fallthru
        _
      // Predicated region
      $region25: #{tpu_custom_call.1} parent=11 // pred_check
        %p171 = pneg %p121
      $region26: #{tpu_custom_call.1} parent=11 // pred_check_branch
        %173 = sbr.rel (%p171) target = $region28
      $region27: #{tpu_custom_call.1} parent=11 // pred_region
        _
      $region28: #{tpu_custom_call.1} parent=11 // pred_fallthru
        _
    $region12: #{tpu_custom_call.1} parent=5 // pred_fallthru
      _
    %p174 = scmp.lt.s32.totalorder %s11, 2
    // Predicated region
    $region29: #{tpu_custom_call.1} parent=5 // pred_check
      %p175 = pneg %p174
    $region30: #{tpu_custom_call.1} parent=5 // pred_check_branch
      %177 = sbr.rel (%p175) target = $region32
    $region31: #{tpu_custom_call.1} parent=5 // pred_region
      // Predicated region
      $region33: #{tpu_custom_call.1} parent=31 // pred_check
        %p178 = pneg %p31
      $region34: #{tpu_custom_call.1} parent=31 // pred_check_branch
        %180 = sbr.rel (%p178) target = $region36
      $region35: #{tpu_custom_call.1} parent=31 // pred_region
        %s181 = smul.u32 64, %s11
        %p182 = scmp.lt.s32.totalorder %s181, 127
        %s183 = scalar_select %p182, %s181, 127
        %s184 = smul.addr %s183, 4
        %s185 = scalar_lea.vmem %s0, %s184
        %s186 = smul.u32 64, %s11
      $region36: #{tpu_custom_call.1} parent=31 // pred_fallthru
        _
    $region32: #{tpu_custom_call.1} parent=5 // pred_fallthru
      _
    %p187 = scmp.le.s32.totalorder 1, %s11
    %p188 = scmp.lt.s32.totalorder %s11, 3
    %p189 = pnand %p187, %p188
    %p190 = pneg %p189
    // Predicated region
    $region37: #{tpu_custom_call.1} parent=5 // pred_check
      _
    $region38: #{tpu_custom_call.1} parent=5 // pred_check_branch
      %192 = sbr.rel (%p189) target = $region40
    $region39: #{tpu_custom_call.1} parent=5 // pred_region
      %s193 = ssub.s32 %s11, 1
      %s194 = smul.u32 64, %s16
      %p195 = scmp.lt.s32.totalorder %s194, 127
      %s196 = scalar_select %p195, %s194, 127
      %s197 = smul.addr %s196, 4
      %s198 = scalar_lea.vmem %s0, %s197
      %p199 = pneg %p37
      %p200 = pneg %p34
      %p201 = pneg %p58
      %p202 = pneg %p55
      %p203 = pneg %p79
      %p204 = pneg %p76
      %p205 = pneg %p100
      %p206 = pneg %p97
      %p207 = pneg %p121
      %p208 = pneg %p118
      %p209 = pneg %p147
      %p210 = pneg %p144
      %s211 = smul.u32 64, %s16
      %p212 = scmp.lt.s32.totalorder %s211, 127
      %s213 = scalar_select %p212, %s211, 127
      %s214 = smul.addr %s213, 4
      %s215 = scalar_lea.vmem %s5, %s214
      %s216 = smul.u32 64, %s16
      %p217 = scmp.lt.s32.totalorder %s216, 127
      %s218 = scalar_select %p217, %s216, 127
      %s219 = smul.addr %s218, 4
      %s220 = scalar_lea.vmem %s0, %s219
      %s221 = smul.u32 64, %s16
      %s222 = smul.u32 64, %s16
      %p223 = scmp.lt.s32.totalorder %s222, 127
      %s224 = scalar_select %p223, %s222, 127
      %s225 = smul.addr %s224, 4
      %s226 = scalar_lea.vmem %s5, %s225
      %s227 = smul.u32 64, %s16
      %v229 = vld [vmem:[%s220] sm:$0xf]
      %v230 = vld [vmem:[%s220 + $0x4] sm:$0xf]
      %v231 = vld [vmem:[%s220 + $0x8] sm:$0xf]
      %v232 = vld [vmem:[%s220 + $0xc] sm:$0xf]
      %v233 = vld [vmem:[%s220 + $0x10] sm:$0xf]
      %v234 = vld [vmem:[%s220 + $0x14] sm:$0xf]
      %v235 = vld [vmem:[%s220 + $0x18] sm:$0xf]
      %v236 = vld [vmem:[%s220 + $0x1c] sm:$0xf]
      %v237 = vld [vmem:[%s220 + $0x20] sm:$0xf]
      %v238 = vld [vmem:[%s220 + $0x24] sm:$0xf]
      %v239 = vld [vmem:[%s220 + $0x28] sm:$0xf]
      %v240 = vld [vmem:[%s220 + $0x2c] sm:$0xf]
      %v241 = vld [vmem:[%s220 + $0x30] sm:$0xf]
      %v242 = vld [vmem:[%s220 + $0x34] sm:$0xf]
      %v243 = vld [vmem:[%s220 + $0x38] sm:$0xf]
      %v244 = vld [vmem:[%s220 + $0x3c] sm:$0xf]
      %v245 = vld [vmem:[%s220 + $0x40] sm:$0xf]
      %v246 = vld [vmem:[%s220 + $0x44] sm:$0xf]
      %v247 = vld [vmem:[%s220 + $0x48] sm:$0xf]
      %v248 = vld [vmem:[%s220 + $0x4c] sm:$0xf]
      %v249 = vld [vmem:[%s220 + $0x50] sm:$0xf]
      %v250 = vld [vmem:[%s220 + $0x54] sm:$0xf]
      %v251 = vld [vmem:[%s220 + $0x58] sm:$0xf]
      %v252 = vld [vmem:[%s220 + $0x5c] sm:$0xf]
      %v253 = vld [vmem:[%s220 + $0x60] sm:$0xf]
      %v254 = vld [vmem:[%s220 + $0x64] sm:$0xf]
      %v255 = vld [vmem:[%s220 + $0x68] sm:$0xf]
      %v256 = vld [vmem:[%s220 + $0x6c] sm:$0xf]
      %v257 = vld [vmem:[%s220 + $0x70] sm:$0xf]
      %v258 = vld [vmem:[%s220 + $0x74] sm:$0xf]
      %v259 = vld [vmem:[%s220 + $0x78] sm:$0xf]
      %v260 = vld [vmem:[%s220 + $0x7c] sm:$0xf]
      %v261 = vld [vmem:[%s220 + $0x80] sm:$0xf]
      %v262 = vld [vmem:[%s220 + $0x84] sm:$0xf]
      %v263 = vld [vmem:[%s220 + $0x88] sm:$0xf]
      %v264 = vld [vmem:[%s220 + $0x8c] sm:$0xf]
      %v265 = vld [vmem:[%s220 + $0x90] sm:$0xf]
      %v266 = vld [vmem:[%s220 + $0x94] sm:$0xf]
      %v267 = vld [vmem:[%s220 + $0x98] sm:$0xf]
      %v268 = vld [vmem:[%s220 + $0x9c] sm:$0xf]
      %v269 = vld [vmem:[%s220 + $0xa0] sm:$0xf]
      %v270 = vld [vmem:[%s220 + $0xa4] sm:$0xf]
      %v271 = vld [vmem:[%s220 + $0xa8] sm:$0xf]
      %v272 = vld [vmem:[%s220 + $0xac] sm:$0xf]
      %v273 = vld [vmem:[%s220 + $0xb0] sm:$0xf]
      %v274 = vld [vmem:[%s220 + $0xb4] sm:$0xf]
      %v275 = vld [vmem:[%s220 + $0xb8] sm:$0xf]
      %v276 = vld [vmem:[%s220 + $0xbc] sm:$0xf]
      %v277 = vld [vmem:[%s220 + $0xc0] sm:$0xf]
      %v278 = vld [vmem:[%s220 + $0xc4] sm:$0xf]
      %v279 = vld [vmem:[%s220 + $0xc8] sm:$0xf]
      %v280 = vld [vmem:[%s220 + $0xcc] sm:$0xf]
      %v281 = vld [vmem:[%s220 + $0xd0] sm:$0xf]
      %v282 = vld [vmem:[%s220 + $0xd4] sm:$0xf]
      %v283 = vld [vmem:[%s220 + $0xd8] sm:$0xf]
      %v284 = vld [vmem:[%s220 + $0xdc] sm:$0xf]
      %v285 = vld [vmem:[%s220 + $0xe0] sm:$0xf]
      %v286 = vld [vmem:[%s220 + $0xe4] sm:$0xf]
      %v287 = vld [vmem:[%s220 + $0xe8] sm:$0xf]
      %v288 = vld [vmem:[%s220 + $0xec] sm:$0xf]
      %v289 = vld [vmem:[%s220 + $0xf0] sm:$0xf]
      %v290 = vld [vmem:[%s220 + $0xf4] sm:$0xf]
      %v291 = vld [vmem:[%s220 + $0xf8] sm:$0xf]
      %v292 = vld [vmem:[%s220 + $0xfc] sm:$0xf]
      %v293 = vunpack.c.l.bf16 %v229
      %v294 = vunpack.c.l.bf16 %v230
      %v295 = vunpack.c.l.bf16 %v231
      %v296 = vunpack.c.l.bf16 %v232
      %v297 = vunpack.c.l.bf16 %v233
      %v298 = vunpack.c.l.bf16 %v234
      %v299 = vunpack.c.l.bf16 %v235
      %v300 = vunpack.c.l.bf16 %v236
      %v301 = vunpack.c.l.bf16 %v237
      %v302 = vunpack.c.l.bf16 %v238
      %v303 = vunpack.c.l.bf16 %v239
      %v304 = vunpack.c.l.bf16 %v240
      %v305 = vunpack.c.l.bf16 %v241
      %v306 = vunpack.c.l.bf16 %v242
      %v307 = vunpack.c.l.bf16 %v243
      %v308 = vunpack.c.l.bf16 %v244
      %v309 = vunpack.c.l.bf16 %v245
      %v310 = vunpack.c.l.bf16 %v246
      %v311 = vunpack.c.l.bf16 %v247
      %v312 = vunpack.c.l.bf16 %v248
      %v313 = vunpack.c.l.bf16 %v249
      %v314 = vunpack.c.l.bf16 %v250
      %v315 = vunpack.c.l.bf16 %v251
      %v316 = vunpack.c.l.bf16 %v252
      %v317 = vunpack.c.l.bf16 %v253
      %v318 = vunpack.c.l.bf16 %v254
      %v319 = vunpack.c.l.bf16 %v255
      %v320 = vunpack.c.l.bf16 %v256
      %v321 = vunpack.c.l.bf16 %v257
      %v322 = vunpack.c.l.bf16 %v258
      %v323 = vunpack.c.l.bf16 %v259
      %v324 = vunpack.c.l.bf16 %v260
      %v325 = vunpack.c.l.bf16 %v261
      %v326 = vunpack.c.l.bf16 %v262
      %v327 = vunpack.c.l.bf16 %v263
      %v328 = vunpack.c.l.bf16 %v264
      %v329 = vunpack.c.l.bf16 %v265
      %v330 = vunpack.c.l.bf16 %v266
      %v331 = vunpack.c.l.bf16 %v267
      %v332 = vunpack.c.l.bf16 %v268
      %v333 = vunpack.c.l.bf16 %v269
      %v334 = vunpack.c.l.bf16 %v270
      %v335 = vunpack.c.l.bf16 %v271
      %v336 = vunpack.c.l.bf16 %v272
      %v337 = vunpack.c.l.bf16 %v273
      %v338 = vunpack.c.l.bf16 %v274
      %v339 = vunpack.c.l.bf16 %v275
      %v340 = vunpack.c.l.bf16 %v276
      %v341 = vunpack.c.l.bf16 %v277
      %v342 = vunpack.c.l.bf16 %v278
      %v343 = vunpack.c.l.bf16 %v279
      %v344 = vunpack.c.l.bf16 %v280
      %v345 = vunpack.c.l.bf16 %v281
      %v346 = vunpack.c.l.bf16 %v282
      %v347 = vunpack.c.l.bf16 %v283
      %v348 = vunpack.c.l.bf16 %v284
      %v349 = vunpack.c.l.bf16 %v285
      %v350 = vunpack.c.l.bf16 %v286
      %v351 = vunpack.c.l.bf16 %v287
      %v352 = vunpack.c.l.bf16 %v288
      %v353 = vunpack.c.l.bf16 %v289
      %v354 = vunpack.c.l.bf16 %v290
      %v355 = vunpack.c.l.bf16 %v291
      %v356 = vunpack.c.l.bf16 %v292
      %vm357 = vcmask 261120
      %v358 = vsel %vm357, %v293, 0.0
      %359 = vadd.xlane.f32.xlu0 %v358
      %v360 = vpop.xlane.xlu0 %359
      %v361 = vsel %vm357, %v294, 0.0
      %362 = vadd.xlane.f32.xlu0 %v361
      %v363 = vpop.xlane.xlu0 %362
      %v364 = vsel %vm357, %v295, 0.0
      %365 = vadd.xlane.f32.xlu0 %v364
      %v366 = vpop.xlane.xlu0 %365
      %v367 = vsel %vm357, %v296, 0.0
      %368 = vadd.xlane.f32.xlu0 %v367
      %v369 = vpop.xlane.xlu0 %368
      %v370 = vsel %vm357, %v297, 0.0
      %371 = vadd.xlane.f32.xlu0 %v370
      %v372 = vpop.xlane.xlu0 %371
      %v373 = vsel %vm357, %v298, 0.0
      %374 = vadd.xlane.f32.xlu0 %v373
      %v375 = vpop.xlane.xlu0 %374
      %v376 = vsel %vm357, %v299, 0.0
      %377 = vadd.xlane.f32.xlu0 %v376
      %v378 = vpop.xlane.xlu0 %377
      %v379 = vsel %vm357, %v300, 0.0
      %380 = vadd.xlane.f32.xlu0 %v379
      %v381 = vpop.xlane.xlu0 %380
      %v382 = vsel %vm357, %v301, 0.0
      %383 = vadd.xlane.f32.xlu0 %v382
      %v384 = vpop.xlane.xlu0 %383
      %v385 = vsel %vm357, %v302, 0.0
      %386 = vadd.xlane.f32.xlu0 %v385
      %v387 = vpop.xlane.xlu0 %386
      %v388 = vsel %vm357, %v303, 0.0
      %389 = vadd.xlane.f32.xlu0 %v388
      %v390 = vpop.xlane.xlu0 %389
      %v391 = vsel %vm357, %v304, 0.0
      %392 = vadd.xlane.f32.xlu0 %v391
      %v393 = vpop.xlane.xlu0 %392
      %v394 = vsel %vm357, %v305, 0.0
      %395 = vadd.xlane.f32.xlu0 %v394
      %v396 = vpop.xlane.xlu0 %395
      %v397 = vsel %vm357, %v306, 0.0
      %398 = vadd.xlane.f32.xlu0 %v397
      %v399 = vpop.xlane.xlu0 %398
      %v400 = vsel %vm357, %v307, 0.0
      %401 = vadd.xlane.f32.xlu0 %v400
      %v402 = vpop.xlane.xlu0 %401
      %v403 = vsel %vm357, %v308, 0.0
      %404 = vadd.xlane.f32.xlu0 %v403
      %v405 = vpop.xlane.xlu0 %404
      %v406 = vsel %vm357, %v309, 0.0
      %407 = vadd.xlane.f32.xlu0 %v406
      %v408 = vpop.xlane.xlu0 %407
      %v409 = vsel %vm357, %v310, 0.0
      %410 = vadd.xlane.f32.xlu0 %v409
      %v411 = vpop.xlane.xlu0 %410
      %v412 = vsel %vm357, %v311, 0.0
      %413 = vadd.xlane.f32.xlu0 %v412
      %v414 = vpop.xlane.xlu0 %413
      %v415 = vsel %vm357, %v312, 0.0
      %416 = vadd.xlane.f32.xlu0 %v415
      %v417 = vpop.xlane.xlu0 %416
      %v418 = vsel %vm357, %v313, 0.0
      %419 = vadd.xlane.f32.xlu0 %v418
      %v420 = vpop.xlane.xlu0 %419
      %v421 = vsel %vm357, %v314, 0.0
      %422 = vadd.xlane.f32.xlu0 %v421
      %v423 = vpop.xlane.xlu0 %422
      %v424 = vsel %vm357, %v315, 0.0
      %425 = vadd.xlane.f32.xlu0 %v424
      %v426 = vpop.xlane.xlu0 %425
      %v427 = vsel %vm357, %v316, 0.0
      %428 = vadd.xlane.f32.xlu0 %v427
      %v429 = vpop.xlane.xlu0 %428
      %v430 = vsel %vm357, %v317, 0.0
      %431 = vadd.xlane.f32.xlu0 %v430
      %v432 = vpop.xlane.xlu0 %431
      %v433 = vsel %vm357, %v318, 0.0
      %434 = vadd.xlane.f32.xlu0 %v433
      %v435 = vpop.xlane.xlu0 %434
      %v436 = vsel %vm357, %v319, 0.0
      %437 = vadd.xlane.f32.xlu0 %v436
      %v438 = vpop.xlane.xlu0 %437
      %v439 = vsel %vm357, %v320, 0.0
      %440 = vadd.xlane.f32.xlu0 %v439
      %v441 = vpop.xlane.xlu0 %440
      %v442 = vsel %vm357, %v321, 0.0
      %443 = vadd.xlane.f32.xlu0 %v442
      %v444 = vpop.xlane.xlu0 %443
      %v445 = vsel %vm357, %v322, 0.0
      %446 = vadd.xlane.f32.xlu0 %v445
      %v447 = vpop.xlane.xlu0 %446
      %v448 = vsel %vm357, %v323, 0.0
      %449 = vadd.xlane.f32.xlu0 %v448
      %v450 = vpop.xlane.xlu0 %449
      %v451 = vsel %vm357, %v324, 0.0
      %452 = vadd.xlane.f32.xlu0 %v451
      %v453 = vpop.xlane.xlu0 %452
      %v454 = vsel %vm357, %v325, 0.0
      %455 = vadd.xlane.f32.xlu0 %v454
      %v456 = vpop.xlane.xlu0 %455
      %v457 = vsel %vm357, %v326, 0.0
      %458 = vadd.xlane.f32.xlu0 %v457
      %v459 = vpop.xlane.xlu0 %458
      %v460 = vsel %vm357, %v327, 0.0
      %461 = vadd.xlane.f32.xlu0 %v460
      %v462 = vpop.xlane.xlu0 %461
      %v463 = vsel %vm357, %v328, 0.0
      %464 = vadd.xlane.f32.xlu0 %v463
      %v465 = vpop.xlane.xlu0 %464
      %v466 = vsel %vm357, %v329, 0.0
      %467 = vadd.xlane.f32.xlu0 %v466
      %v468 = vpop.xlane.xlu0 %467
      %v469 = vsel %vm357, %v330, 0.0
      %470 = vadd.xlane.f32.xlu0 %v469
      %v471 = vpop.xlane.xlu0 %470
      %v472 = vsel %vm357, %v331, 0.0
      %473 = vadd.xlane.f32.xlu0 %v472
      %v474 = vpop.xlane.xlu0 %473
      %v475 = vsel %vm357, %v332, 0.0
      %476 = vadd.xlane.f32.xlu0 %v475
      %v477 = vpop.xlane.xlu0 %476
      %v478 = vsel %vm357, %v333, 0.0
      %479 = vadd.xlane.f32.xlu0 %v478
      %v480 = vpop.xlane.xlu0 %479
      %v481 = vsel %vm357, %v334, 0.0
      %482 = vadd.xlane.f32.xlu0 %v481
      %v483 = vpop.xlane.xlu0 %482
      %v484 = vsel %vm357, %v335, 0.0
      %485 = vadd.xlane.f32.xlu0 %v484
      %v486 = vpop.xlane.xlu0 %485
      %v487 = vsel %vm357, %v336, 0.0
      %488 = vadd.xlane.f32.xlu0 %v487
      %v489 = vpop.xlane.xlu0 %488
      %v490 = vsel %vm357, %v337, 0.0
      %491 = vadd.xlane.f32.xlu0 %v490
      %v492 = vpop.xlane.xlu0 %491
      %v493 = vsel %vm357, %v338, 0.0
      %494 = vadd.xlane.f32.xlu0 %v493
      %v495 = vpop.xlane.xlu0 %494
      %v496 = vsel %vm357, %v339, 0.0
      %497 = vadd.xlane.f32.xlu0 %v496
      %v498 = vpop.xlane.xlu0 %497
      %v499 = vsel %vm357, %v340, 0.0
      %500 = vadd.xlane.f32.xlu0 %v499
      %v501 = vpop.xlane.xlu0 %500
      %v502 = vsel %vm357, %v341, 0.0
      %503 = vadd.xlane.f32.xlu0 %v502
      %v504 = vpop.xlane.xlu0 %503
      %v505 = vsel %vm357, %v342, 0.0
      %506 = vadd.xlane.f32.xlu0 %v505
      %v507 = vpop.xlane.xlu0 %506
      %v508 = vsel %vm357, %v343, 0.0
      %509 = vadd.xlane.f32.xlu0 %v508
      %v510 = vpop.xlane.xlu0 %509
      %v511 = vsel %vm357, %v344, 0.0
      %512 = vadd.xlane.f32.xlu0 %v511
      %v513 = vpop.xlane.xlu0 %512
      %v514 = vsel %vm357, %v345, 0.0
      %515 = vadd.xlane.f32.xlu0 %v514
      %v516 = vpop.xlane.xlu0 %515
      %v517 = vsel %vm357, %v346, 0.0
      %518 = vadd.xlane.f32.xlu0 %v517
      %v519 = vpop.xlane.xlu0 %518
      %v520 = vsel %vm357, %v347, 0.0
      %521 = vadd.xlane.f32.xlu0 %v520
      %v522 = vpop.xlane.xlu0 %521
      %v523 = vsel %vm357, %v348, 0.0
      %524 = vadd.xlane.f32.xlu0 %v523
      %v525 = vpop.xlane.xlu0 %524
      %v526 = vsel %vm357, %v349, 0.0
      %527 = vadd.xlane.f32.xlu0 %v526
      %v528 = vpop.xlane.xlu0 %527
      %v529 = vsel %vm357, %v350, 0.0
      %530 = vadd.xlane.f32.xlu0 %v529
      %v531 = vpop.xlane.xlu0 %530
      %v532 = vsel %vm357, %v351, 0.0
      %533 = vadd.xlane.f32.xlu0 %v532
      %v534 = vpop.xlane.xlu0 %533
      %v535 = vsel %vm357, %v352, 0.0
      %536 = vadd.xlane.f32.xlu0 %v535
      %v537 = vpop.xlane.xlu0 %536
      %v538 = vsel %vm357, %v353, 0.0
      %539 = vadd.xlane.f32.xlu0 %v538
      %v540 = vpop.xlane.xlu0 %539
      %v541 = vsel %vm357, %v354, 0.0
      %542 = vadd.xlane.f32.xlu0 %v541
      %v543 = vpop.xlane.xlu0 %542
      %v544 = vsel %vm357, %v355, 0.0
      %545 = vadd.xlane.f32.xlu0 %v544
      %v546 = vpop.xlane.xlu0 %545
      %v547 = vsel %vm357, %v356, 0.0
      %548 = vadd.xlane.f32.xlu0 %v547
      %v549 = vpop.xlane.xlu0 %548
      %v550 = vrcp.pop 32.0
      %v551 = vmul.f32 %v360, %v550
      %v552 = vmul.f32 %v363, %v550
      %v553 = vmul.f32 %v366, %v550
      %v554 = vmul.f32 %v369, %v550
      %v555 = vmul.f32 %v372, %v550
      %v556 = vmul.f32 %v375, %v550
      %v557 = vmul.f32 %v378, %v550
      %v558 = vmul.f32 %v381, %v550
      %v559 = vmul.f32 %v384, %v550
      %v560 = vmul.f32 %v387, %v550
      %v561 = vmul.f32 %v390, %v550
      %v562 = vmul.f32 %v393, %v550
      %v563 = vmul.f32 %v396, %v550
      %v564 = vmul.f32 %v399, %v550
      %v565 = vmul.f32 %v402, %v550
      %v566 = vmul.f32 %v405, %v550
      %v567 = vmul.f32 %v408, %v550
      %v568 = vmul.f32 %v411, %v550
      %v569 = vmul.f32 %v414, %v550
      %v570 = vmul.f32 %v417, %v550
      %v571 = vmul.f32 %v420, %v550
      %v572 = vmul.f32 %v423, %v550
      %v573 = vmul.f32 %v426, %v550
      %v574 = vmul.f32 %v429, %v550
      %v575 = vmul.f32 %v432, %v550
      %v576 = vmul.f32 %v435, %v550
      %v577 = vmul.f32 %v438, %v550
      %v578 = vmul.f32 %v441, %v550
      %v579 = vmul.f32 %v444, %v550
      %v580 = vmul.f32 %v447, %v550
      %v581 = vmul.f32 %v450, %v550
      %v582 = vmul.f32 %v453, %v550
      %v583 = vmul.f32 %v456, %v550
      %v584 = vmul.f32 %v459, %v550
      %v585 = vmul.f32 %v462, %v550
      %v586 = vmul.f32 %v465, %v550
      %v587 = vmul.f32 %v468, %v550
      %v588 = vmul.f32 %v471, %v550
      %v589 = vmul.f32 %v474, %v550
      %v590 = vmul.f32 %v477, %v550
      %v591 = vmul.f32 %v480, %v550
      %v592 = vmul.f32 %v483, %v550
      %v593 = vmul.f32 %v486, %v550
      %v594 = vmul.f32 %v489, %v550
      %v595 = vmul.f32 %v492, %v550
      %v596 = vmul.f32 %v495, %v550
      %v597 = vmul.f32 %v498, %v550
      %v598 = vmul.f32 %v501, %v550
      %v599 = vmul.f32 %v504, %v550
      %v600 = vmul.f32 %v507, %v550
      %v601 = vmul.f32 %v510, %v550
      %v602 = vmul.f32 %v513, %v550
      %v603 = vmul.f32 %v516, %v550
      %v604 = vmul.f32 %v519, %v550
      %v605 = vmul.f32 %v522, %v550
      %v606 = vmul.f32 %v525, %v550
      %v607 = vmul.f32 %v528, %v550
      %v608 = vmul.f32 %v531, %v550
      %v609 = vmul.f32 %v534, %v550
      %v610 = vmul.f32 %v537, %v550
      %v611 = vmul.f32 %v540, %v550
      %v612 = vmul.f32 %v543, %v550
      %v613 = vmul.f32 %v546, %v550
      %v614 = vmul.f32 %v549, %v550
      %v615 = vsub.f32 %v293, %v551
      %v616 = vsub.f32 %v294, %v552
      %v617 = vsub.f32 %v295, %v553
      %v618 = vsub.f32 %v296, %v554
      %v619 = vsub.f32 %v297, %v555
      %v620 = vsub.f32 %v298, %v556
      %v621 = vsub.f32 %v299, %v557
      %v622 = vsub.f32 %v300, %v558
      %v623 = vsub.f32 %v301, %v559
      %v624 = vsub.f32 %v302, %v560
      %v625 = vsub.f32 %v303, %v561
      %v626 = vsub.f32 %v304, %v562
      %v627 = vsub.f32 %v305, %v563
      %v628 = vsub.f32 %v306, %v564
      %v629 = vsub.f32 %v307, %v565
      %v630 = vsub.f32 %v308, %v566
      %v631 = vsub.f32 %v309, %v567
      %v632 = vsub.f32 %v310, %v568
      %v633 = vsub.f32 %v311, %v569
      %v634 = vsub.f32 %v312, %v570
      %v635 = vsub.f32 %v313, %v571
      %v636 = vsub.f32 %v314, %v572
      %v637 = vsub.f32 %v315, %v573
      %v638 = vsub.f32 %v316, %v574
      %v639 = vsub.f32 %v317, %v575
      %v640 = vsub.f32 %v318, %v576
      %v641 = vsub.f32 %v319, %v577
      %v642 = vsub.f32 %v320, %v578
      %v643 = vsub.f32 %v321, %v579
      %v644 = vsub.f32 %v322, %v580
      %v645 = vsub.f32 %v323, %v581
      %v646 = vsub.f32 %v324, %v582
      %v647 = vsub.f32 %v325, %v583
      %v648 = vsub.f32 %v326, %v584
      %v649 = vsub.f32 %v327, %v585
      %v650 = vsub.f32 %v328, %v586
      %v651 = vsub.f32 %v329, %v587
      %v652 = vsub.f32 %v330, %v588
      %v653 = vsub.f32 %v331, %v589
      %v654 = vsub.f32 %v332, %v590
      %v655 = vsub.f32 %v333, %v591
      %v656 = vsub.f32 %v334, %v592
      %v657 = vsub.f32 %v335, %v593
      %v658 = vsub.f32 %v336, %v594
      %v659 = vsub.f32 %v337, %v595
      %v660 = vsub.f32 %v338, %v596
      %v661 = vsub.f32 %v339, %v597
      %v662 = vsub.f32 %v340, %v598
      %v663 = vsub.f32 %v341, %v599
      %v664 = vsub.f32 %v342, %v600
      %v665 = vsub.f32 %v343, %v601
      %v666 = vsub.f32 %v344, %v602
      %v667 = vsub.f32 %v345, %v603
      %v668 = vsub.f32 %v346, %v604
      %v669 = vsub.f32 %v347, %v605
      %v670 = vsub.f32 %v348, %v606
      %v671 = vsub.f32 %v349, %v607
      %v672 = vsub.f32 %v350, %v608
      %v673 = vsub.f32 %v351, %v609
      %v674 = vsub.f32 %v352, %v610
      %v675 = vsub.f32 %v353, %v611
      %v676 = vsub.f32 %v354, %v612
      %v677 = vsub.f32 %v355, %v613
      %v678 = vsub.f32 %v356, %v614
      %v679 = vmul.f32 %v615, %v615
      %v680 = vmul.f32 %v616, %v616
      %v681 = vmul.f32 %v617, %v617
      %v682 = vmul.f32 %v618, %v618
      %v683 = vmul.f32 %v619, %v619
      %v684 = vmul.f32 %v620, %v620
      %v685 = vmul.f32 %v621, %v621
      %v686 = vmul.f32 %v622, %v622
      %v687 = vmul.f32 %v623, %v623
      %v688 = vmul.f32 %v624, %v624
      %v689 = vmul.f32 %v625, %v625
      %v690 = vmul.f32 %v626, %v626
      %v691 = vmul.f32 %v627, %v627
      %v692 = vmul.f32 %v628, %v628
      %v693 = vmul.f32 %v629, %v629
      %v694 = vmul.f32 %v630, %v630
      %v695 = vmul.f32 %v631, %v631
      %v696 = vmul.f32 %v632, %v632
      %v697 = vmul.f32 %v633, %v633
      %v698 = vmul.f32 %v634, %v634
      %v699 = vmul.f32 %v635, %v635
      %v700 = vmul.f32 %v636, %v636
      %v701 = vmul.f32 %v637, %v637
      %v702 = vmul.f32 %v638, %v638
      %v703 = vmul.f32 %v639, %v639
      %v704 = vmul.f32 %v640, %v640
      %v705 = vmul.f32 %v641, %v641
      %v706 = vmul.f32 %v642, %v642
      %v707 = vmul.f32 %v643, %v643
      %v708 = vmul.f32 %v644, %v644
      %v709 = vmul.f32 %v645, %v645
      %v710 = vmul.f32 %v646, %v646
      %v711 = vmul.f32 %v647, %v647
      %v712 = vmul.f32 %v648, %v648
      %v713 = vmul.f32 %v649, %v649
      %v714 = vmul.f32 %v650, %v650
      %v715 = vmul.f32 %v651, %v651
      %v716 = vmul.f32 %v652, %v652
      %v717 = vmul.f32 %v653, %v653
      %v718 = vmul.f32 %v654, %v654
      %v719 = vmul.f32 %v655, %v655
      %v720 = vmul.f32 %v656, %v656
      %v721 = vmul.f32 %v657, %v657
      %v722 = vmul.f32 %v658, %v658
      %v723 = vmul.f32 %v659, %v659
      %v724 = vmul.f32 %v660, %v660
      %v725 = vmul.f32 %v661, %v661
      %v726 = vmul.f32 %v662, %v662
      %v727 = vmul.f32 %v663, %v663
      %v728 = vmul.f32 %v664, %v664
      %v729 = vmul.f32 %v665, %v665
      %v730 = vmul.f32 %v666, %v666
      %v731 = vmul.f32 %v667, %v667
      %v732 = vmul.f32 %v668, %v668
      %v733 = vmul.f32 %v669, %v669
      %v734 = vmul.f32 %v670, %v670
      %v735 = vmul.f32 %v671, %v671
      %v736 = vmul.f32 %v672, %v672
      %v737 = vmul.f32 %v673, %v673
      %v738 = vmul.f32 %v674, %v674
      %v739 = vmul.f32 %v675, %v675
      %v740 = vmul.f32 %v676, %v676
      %v741 = vmul.f32 %v677, %v677
      %v742 = vmul.f32 %v678, %v678
      %v743 = vsel %vm357, %v679, 0.0
      %744 = vadd.xlane.f32.xlu0 %v743
      %v745 = vpop.xlane.xlu0 %744
      %v746 = vsel %vm357, %v680, 0.0
      %747 = vadd.xlane.f32.xlu0 %v746
      %v748 = vpop.xlane.xlu0 %747
      %v749 = vsel %vm357, %v681, 0.0
      %750 = vadd.xlane.f32.xlu0 %v749
      %v751 = vpop.xlane.xlu0 %750
      %v752 = vsel %vm357, %v682, 0.0
      %753 = vadd.xlane.f32.xlu0 %v752
      %v754 = vpop.xlane.xlu0 %753
      %v755 = vsel %vm357, %v683, 0.0
      %756 = vadd.xlane.f32.xlu0 %v755
      %v757 = vpop.xlane.xlu0 %756
      %v758 = vsel %vm357, %v684, 0.0
      %759 = vadd.xlane.f32.xlu0 %v758
      %v760 = vpop.xlane.xlu0 %759
      %v761 = vsel %vm357, %v685, 0.0
      %762 = vadd.xlane.f32.xlu0 %v761
      %v763 = vpop.xlane.xlu0 %762
      %v764 = vsel %vm357, %v686, 0.0
      %765 = vadd.xlane.f32.xlu0 %v764
      %v766 = vpop.xlane.xlu0 %765
      %v767 = vsel %vm357, %v687, 0.0
      %768 = vadd.xlane.f32.xlu0 %v767
      %v769 = vpop.xlane.xlu0 %768
      %v770 = vsel %vm357, %v688, 0.0
      %771 = vadd.xlane.f32.xlu0 %v770
      %v772 = vpop.xlane.xlu0 %771
      %v773 = vsel %vm357, %v689, 0.0
      %774 = vadd.xlane.f32.xlu0 %v773
      %v775 = vpop.xlane.xlu0 %774
      %v776 = vsel %vm357, %v690, 0.0
      %777 = vadd.xlane.f32.xlu0 %v776
      %v778 = vpop.xlane.xlu0 %777
      %v779 = vsel %vm357, %v691, 0.0
      %780 = vadd.xlane.f32.xlu0 %v779
      %v781 = vpop.xlane.xlu0 %780
      %v782 = vsel %vm357, %v692, 0.0
      %783 = vadd.xlane.f32.xlu0 %v782
      %v784 = vpop.xlane.xlu0 %783
      %v785 = vsel %vm357, %v693, 0.0
      %786 = vadd.xlane.f32.xlu0 %v785
      %v787 = vpop.xlane.xlu0 %786
      %v788 = vsel %vm357, %v694, 0.0
      %789 = vadd.xlane.f32.xlu0 %v788
      %v790 = vpop.xlane.xlu0 %789
      %v791 = vsel %vm357, %v695, 0.0
      %792 = vadd.xlane.f32.xlu0 %v791
      %v793 = vpop.xlane.xlu0 %792
      %v794 = vsel %vm357, %v696, 0.0
      %795 = vadd.xlane.f32.xlu0 %v794
      %v796 = vpop.xlane.xlu0 %795
      %v797 = vsel %vm357, %v697, 0.0
      %798 = vadd.xlane.f32.xlu0 %v797
      %v799 = vpop.xlane.xlu0 %798
      %v800 = vsel %vm357, %v698, 0.0
      %801 = vadd.xlane.f32.xlu0 %v800
      %v802 = vpop.xlane.xlu0 %801
      %v803 = vsel %vm357, %v699, 0.0
      %804 = vadd.xlane.f32.xlu0 %v803
      %v805 = vpop.xlane.xlu0 %804
      %v806 = vsel %vm357, %v700, 0.0
      %807 = vadd.xlane.f32.xlu0 %v806
      %v808 = vpop.xlane.xlu0 %807
      %v809 = vsel %vm357, %v701, 0.0
      %810 = vadd.xlane.f32.xlu0 %v809
      %v811 = vpop.xlane.xlu0 %810
      %v812 = vsel %vm357, %v702, 0.0
      %813 = vadd.xlane.f32.xlu0 %v812
      %v814 = vpop.xlane.xlu0 %813
      %v815 = vsel %vm357, %v703, 0.0
      %816 = vadd.xlane.f32.xlu0 %v815
      %v817 = vpop.xlane.xlu0 %816
      %v818 = vsel %vm357, %v704, 0.0
      %819 = vadd.xlane.f32.xlu0 %v818
      %v820 = vpop.xlane.xlu0 %819
      %v821 = vsel %vm357, %v705, 0.0
      %822 = vadd.xlane.f32.xlu0 %v821
      %v823 = vpop.xlane.xlu0 %822
      %v824 = vsel %vm357, %v706, 0.0
      %825 = vadd.xlane.f32.xlu0 %v824
      %v826 = vpop.xlane.xlu0 %825
      %v827 = vsel %vm357, %v707, 0.0
      %828 = vadd.xlane.f32.xlu0 %v827
      %v829 = vpop.xlane.xlu0 %828
      %v830 = vsel %vm357, %v708, 0.0
      %831 = vadd.xlane.f32.xlu0 %v830
      %v832 = vpop.xlane.xlu0 %831
      %v833 = vsel %vm357, %v709, 0.0
      %834 = vadd.xlane.f32.xlu0 %v833
      %v835 = vpop.xlane.xlu0 %834
      %v836 = vsel %vm357, %v710, 0.0
      %837 = vadd.xlane.f32.xlu0 %v836
      %v838 = vpop.xlane.xlu0 %837
      %v839 = vsel %vm357, %v711, 0.0
      %840 = vadd.xlane.f32.xlu0 %v839
      %v841 = vpop.xlane.xlu0 %840
      %v842 = vsel %vm357, %v712, 0.0
      %843 = vadd.xlane.f32.xlu0 %v842
      %v844 = vpop.xlane.xlu0 %843
      %v845 = vsel %vm357, %v713, 0.0
      %846 = vadd.xlane.f32.xlu0 %v845
      %v847 = vpop.xlane.xlu0 %846
      %v848 = vsel %vm357, %v714, 0.0
      %849 = vadd.xlane.f32.xlu0 %v848
      %v850 = vpop.xlane.xlu0 %849
      %v851 = vsel %vm357, %v715, 0.0
      %852 = vadd.xlane.f32.xlu0 %v851
      %v853 = vpop.xlane.xlu0 %852
      %v854 = vsel %vm357, %v716, 0.0
      %855 = vadd.xlane.f32.xlu0 %v854
      %v856 = vpop.xlane.xlu0 %855
      %v857 = vsel %vm357, %v717, 0.0
      %858 = vadd.xlane.f32.xlu0 %v857
      %v859 = vpop.xlane.xlu0 %858
      %v860 = vsel %vm357, %v718, 0.0
      %861 = vadd.xlane.f32.xlu0 %v860
      %v862 = vpop.xlane.xlu0 %861
      %v863 = vsel %vm357, %v719, 0.0
      %864 = vadd.xlane.f32.xlu0 %v863
      %v865 = vpop.xlane.xlu0 %864
      %v866 = vsel %vm357, %v720, 0.0
      %867 = vadd.xlane.f32.xlu0 %v866
      %v868 = vpop.xlane.xlu0 %867
      %v869 = vsel %vm357, %v721, 0.0
      %870 = vadd.xlane.f32.xlu0 %v869
      %v871 = vpop.xlane.xlu0 %870
      %v872 = vsel %vm357, %v722, 0.0
      %873 = vadd.xlane.f32.xlu0 %v872
      %v874 = vpop.xlane.xlu0 %873
      %v875 = vsel %vm357, %v723, 0.0
      %876 = vadd.xlane.f32.xlu0 %v875
      %v877 = vpop.xlane.xlu0 %876
      %v878 = vsel %vm357, %v724, 0.0
      %879 = vadd.xlane.f32.xlu0 %v878
      %v880 = vpop.xlane.xlu0 %879
      %v881 = vsel %vm357, %v725, 0.0
      %882 = vadd.xlane.f32.xlu0 %v881
      %v883 = vpop.xlane.xlu0 %882
      %v884 = vsel %vm357, %v726, 0.0
      %885 = vadd.xlane.f32.xlu0 %v884
      %v886 = vpop.xlane.xlu0 %885
      %v887 = vsel %vm357, %v727, 0.0
      %888 = vadd.xlane.f32.xlu0 %v887
      %v889 = vpop.xlane.xlu0 %888
      %v890 = vsel %vm357, %v728, 0.0
      %891 = vadd.xlane.f32.xlu0 %v890
      %v892 = vpop.xlane.xlu0 %891
      %v893 = vsel %vm357, %v729, 0.0
      %894 = vadd.xlane.f32.xlu0 %v893
      %v895 = vpop.xlane.xlu0 %894
      %v896 = vsel %vm357, %v730, 0.0
      %897 = vadd.xlane.f32.xlu0 %v896
      %v898 = vpop.xlane.xlu0 %897
      %v899 = vsel %vm357, %v731, 0.0
      %900 = vadd.xlane.f32.xlu0 %v899
      %v901 = vpop.xlane.xlu0 %900
      %v902 = vsel %vm357, %v732, 0.0
      %903 = vadd.xlane.f32.xlu0 %v902
      %v904 = vpop.xlane.xlu0 %903
      %v905 = vsel %vm357, %v733, 0.0
      %906 = vadd.xlane.f32.xlu0 %v905
      %v907 = vpop.xlane.xlu0 %906
      %v908 = vsel %vm357, %v734, 0.0
      %909 = vadd.xlane.f32.xlu0 %v908
      %v910 = vpop.xlane.xlu0 %909
      %v911 = vsel %vm357, %v735, 0.0
      %912 = vadd.xlane.f32.xlu0 %v911
      %v913 = vpop.xlane.xlu0 %912
      %v914 = vsel %vm357, %v736, 0.0
      %915 = vadd.xlane.f32.xlu0 %v914
      %v916 = vpop.xlane.xlu0 %915
      %v917 = vsel %vm357, %v737, 0.0
      %918 = vadd.xlane.f32.xlu0 %v917
      %v919 = vpop.xlane.xlu0 %918
      %v920 = vsel %vm357, %v738, 0.0
      %921 = vadd.xlane.f32.xlu0 %v920
      %v922 = vpop.xlane.xlu0 %921
      %v923 = vsel %vm357, %v739, 0.0
      %924 = vadd.xlane.f32.xlu0 %v923
      %v925 = vpop.xlane.xlu0 %924
      %v926 = vsel %vm357, %v740, 0.0
      %927 = vadd.xlane.f32.xlu0 %v926
      %v928 = vpop.xlane.xlu0 %927
      %v929 = vsel %vm357, %v741, 0.0
      %930 = vadd.xlane.f32.xlu0 %v929
      %v931 = vpop.xlane.xlu0 %930
      %v932 = vsel %vm357, %v742, 0.0
      %933 = vadd.xlane.f32.xlu0 %v932
      %v934 = vpop.xlane.xlu0 %933
      %v935 = vmul.f32 %v745, %v550
      %v936 = vmul.f32 %v748, %v550
      %v937 = vmul.f32 %v751, %v550
      %v938 = vmul.f32 %v754, %v550
      %v939 = vmul.f32 %v757, %v550
      %v940 = vmul.f32 %v760, %v550
      %v941 = vmul.f32 %v763, %v550
      %v942 = vmul.f32 %v766, %v550
      %v943 = vmul.f32 %v769, %v550
      %v944 = vmul.f32 %v772, %v550
      %v945 = vmul.f32 %v775, %v550
      %v946 = vmul.f32 %v778, %v550
      %v947 = vmul.f32 %v781, %v550
      %v948 = vmul.f32 %v784, %v550
      %v949 = vmul.f32 %v787, %v550
      %v950 = vmul.f32 %v790, %v550
      %v951 = vmul.f32 %v793, %v550
      %v952 = vmul.f32 %v796, %v550
      %v953 = vmul.f32 %v799, %v550
      %v954 = vmul.f32 %v802, %v550
      %v955 = vmul.f32 %v805, %v550
      %v956 = vmul.f32 %v808, %v550
      %v957 = vmul.f32 %v811, %v550
      %v958 = vmul.f32 %v814, %v550
      %v959 = vmul.f32 %v817, %v550
      %v960 = vmul.f32 %v820, %v550
      %v961 = vmul.f32 %v823, %v550
      %v962 = vmul.f32 %v826, %v550
      %v963 = vmul.f32 %v829, %v550
      %v964 = vmul.f32 %v832, %v550
      %v965 = vmul.f32 %v835, %v550
      %v966 = vmul.f32 %v838, %v550
      %v967 = vmul.f32 %v841, %v550
      %v968 = vmul.f32 %v844, %v550
      %v969 = vmul.f32 %v847, %v550
      %v970 = vmul.f32 %v850, %v550
      %v971 = vmul.f32 %v853, %v550
      %v972 = vmul.f32 %v856, %v550
      %v973 = vmul.f32 %v859, %v550
      %v974 = vmul.f32 %v862, %v550
      %v975 = vmul.f32 %v865, %v550
      %v976 = vmul.f32 %v868, %v550
      %v977 = vmul.f32 %v871, %v550
      %v978 = vmul.f32 %v874, %v550
      %v979 = vmul.f32 %v877, %v550
      %v980 = vmul.f32 %v880, %v550
      %v981 = vmul.f32 %v883, %v550
      %v982 = vmul.f32 %v886, %v550
      %v983 = vmul.f32 %v889, %v550
      %v984 = vmul.f32 %v892, %v550
      %v985 = vmul.f32 %v895, %v550
      %v986 = vmul.f32 %v898, %v550
      %v987 = vmul.f32 %v901, %v550
      %v988 = vmul.f32 %v904, %v550
      %v989 = vmul.f32 %v907, %v550
      %v990 = vmul.f32 %v910, %v550
      %v991 = vmul.f32 %v913, %v550
      %v992 = vmul.f32 %v916, %v550
      %v993 = vmul.f32 %v919, %v550
      %v994 = vmul.f32 %v922, %v550
      %v995 = vmul.f32 %v925, %v550
      %v996 = vmul.f32 %v928, %v550
      %v997 = vmul.f32 %v931, %v550
      %v998 = vmul.f32 %v934, %v550
      %v999 = vadd.f32 %v935, 1e-05
      %v1000 = vadd.f32 %v936, 1e-05
      %v1001 = vadd.f32 %v937, 1e-05
      %v1002 = vadd.f32 %v938, 1e-05
      %v1003 = vadd.f32 %v939, 1e-05
      %v1004 = vadd.f32 %v940, 1e-05
      %v1005 = vadd.f32 %v941, 1e-05
      %v1006 = vadd.f32 %v942, 1e-05
      %v1007 = vadd.f32 %v943, 1e-05
      %v1008 = vadd.f32 %v944, 1e-05
      %v1009 = vadd.f32 %v945, 1e-05
      %v1010 = vadd.f32 %v946, 1e-05
      %v1011 = vadd.f32 %v947, 1e-05
      %v1012 = vadd.f32 %v948, 1e-05
      %v1013 = vadd.f32 %v949, 1e-05
      %v1014 = vadd.f32 %v950, 1e-05
      %v1015 = vadd.f32 %v951, 1e-05
      %v1016 = vadd.f32 %v952, 1e-05
      %v1017 = vadd.f32 %v953, 1e-05
      %v1018 = vadd.f32 %v954, 1e-05
      %v1019 = vadd.f32 %v955, 1e-05
      %v1020 = vadd.f32 %v956, 1e-05
      %v1021 = vadd.f32 %v957, 1e-05
      %v1022 = vadd.f32 %v958, 1e-05
      %v1023 = vadd.f32 %v959, 1e-05
      %v1024 = vadd.f32 %v960, 1e-05
      %v1025 = vadd.f32 %v961, 1e-05
      %v1026 = vadd.f32 %v962, 1e-05
      %v1027 = vadd.f32 %v963, 1e-05
      %v1028 = vadd.f32 %v964, 1e-05
      %v1029 = vadd.f32 %v965, 1e-05
      %v1030 = vadd.f32 %v966, 1e-05
      %v1031 = vadd.f32 %v967, 1e-05
      %v1032 = vadd.f32 %v968, 1e-05
      %v1033 = vadd.f32 %v969, 1e-05
      %v1034 = vadd.f32 %v970, 1e-05
      %v1035 = vadd.f32 %v971, 1e-05
      %v1036 = vadd.f32 %v972, 1e-05
      %v1037 = vadd.f32 %v973, 1e-05
      %v1038 = vadd.f32 %v974, 1e-05
      %v1039 = vadd.f32 %v975, 1e-05
      %v1040 = vadd.f32 %v976, 1e-05
      %v1041 = vadd.f32 %v977, 1e-05
      %v1042 = vadd.f32 %v978, 1e-05
      %v1043 = vadd.f32 %v979, 1e-05
      %v1044 = vadd.f32 %v980, 1e-05
      %v1045 = vadd.f32 %v981, 1e-05
      %v1046 = vadd.f32 %v982, 1e-05
      %v1047 = vadd.f32 %v983, 1e-05
      %v1048 = vadd.f32 %v984, 1e-05
      %v1049 = vadd.f32 %v985, 1e-05
      %v1050 = vadd.f32 %v986, 1e-05
      %v1051 = vadd.f32 %v987, 1e-05
      %v1052 = vadd.f32 %v988, 1e-05
      %v1053 = vadd.f32 %v989, 1e-05
      %v1054 = vadd.f32 %v990, 1e-05
      %v1055 = vadd.f32 %v991, 1e-05
      %v1056 = vadd.f32 %v992, 1e-05
      %v1057 = vadd.f32 %v993, 1e-05
      %v1058 = vadd.f32 %v994, 1e-05
      %v1059 = vadd.f32 %v995, 1e-05
      %v1060 = vadd.f32 %v996, 1e-05
      %v1061 = vadd.f32 %v997, 1e-05
      %v1062 = vadd.f32 %v998, 1e-05
      %v1063 = vrsqrt.pop %v999
      %v1064 = vrsqrt.pop %v1000
      %v1065 = vrsqrt.pop %v1001
      %v1066 = vrsqrt.pop %v1002
      %v1067 = vrsqrt.pop %v1003
      %v1068 = vrsqrt.pop %v1004
      %v1069 = vrsqrt.pop %v1005
      %v1070 = vrsqrt.pop %v1006
      %v1071 = vrsqrt.pop %v1007
      %v1072 = vrsqrt.pop %v1008
      %v1073 = vrsqrt.pop %v1009
      %v1074 = vrsqrt.pop %v1010
      %v1075 = vrsqrt.pop %v1011
      %v1076 = vrsqrt.pop %v1012
      %v1077 = vrsqrt.pop %v1013
      %v1078 = vrsqrt.pop %v1014
      %v1079 = vrsqrt.pop %v1015
      %v1080 = vrsqrt.pop %v1016
      %v1081 = vrsqrt.pop %v1017
      %v1082 = vrsqrt.pop %v1018
      %v1083 = vrsqrt.pop %v1019
      %v1084 = vrsqrt.pop %v1020
      %v1085 = vrsqrt.pop %v1021
      %v1086 = vrsqrt.pop %v1022
      %v1087 = vrsqrt.pop %v1023
      %v1088 = vrsqrt.pop %v1024
      %v1089 = vrsqrt.pop %v1025
      %v1090 = vrsqrt.pop %v1026
      %v1091 = vrsqrt.pop %v1027
      %v1092 = vrsqrt.pop %v1028
      %v1093 = vrsqrt.pop %v1029
      %v1094 = vrsqrt.pop %v1030
      %v1095 = vrsqrt.pop %v1031
      %v1096 = vrsqrt.pop %v1032
      %v1097 = vrsqrt.pop %v1033
      %v1098 = vrsqrt.pop %v1034
      %v1099 = vrsqrt.pop %v1035
      %v1100 = vrsqrt.pop %v1036
      %v1101 = vrsqrt.pop %v1037
      %v1102 = vrsqrt.pop %v1038
      %v1103 = vrsqrt.pop %v1039
      %v1104 = vrsqrt.pop %v1040
      %v1105 = vrsqrt.pop %v1041
      %v1106 = vrsqrt.pop %v1042
      %v1107 = vrsqrt.pop %v1043
      %v1108 = vrsqrt.pop %v1044
      %v1109 = vrsqrt.pop %v1045
      %v1110 = vrsqrt.pop %v1046
      %v1111 = vrsqrt.pop %v1047
      %v1112 = vrsqrt.pop %v1048
      %v1113 = vrsqrt.pop %v1049
      %v1114 = vrsqrt.pop %v1050
      %v1115 = vrsqrt.pop %v1051
      %v1116 = vrsqrt.pop %v1052
      %v1117 = vrsqrt.pop %v1053
      %v1118 = vrsqrt.pop %v1054
      %v1119 = vrsqrt.pop %v1055
      %v1120 = vrsqrt.pop %v1056
      %v1121 = vrsqrt.pop %v1057
      %v1122 = vrsqrt.pop %v1058
      %v1123 = vrsqrt.pop %v1059
      %v1124 = vrsqrt.pop %v1060
      %v1125 = vrsqrt.pop %v1061
      %v1126 = vrsqrt.pop %v1062
      %v1127 = vmul.f32 %v615, %v1063
      %v1128 = vmul.f32 %v616, %v1064
      %v1129 = vmul.f32 %v617, %v1065
      %v1130 = vmul.f32 %v618, %v1066
      %v1131 = vmul.f32 %v619, %v1067
      %v1132 = vmul.f32 %v620, %v1068
      %v1133 = vmul.f32 %v621, %v1069
      %v1134 = vmul.f32 %v622, %v1070
      %v1135 = vmul.f32 %v623, %v1071
      %v1136 = vmul.f32 %v624, %v1072
      %v1137 = vmul.f32 %v625, %v1073
      %v1138 = vmul.f32 %v626, %v1074
      %v1139 = vmul.f32 %v627, %v1075
      %v1140 = vmul.f32 %v628, %v1076
      %v1141 = vmul.f32 %v629, %v1077
      %v1142 = vmul.f32 %v630, %v1078
      %v1143 = vmul.f32 %v631, %v1079
      %v1144 = vmul.f32 %v632, %v1080
      %v1145 = vmul.f32 %v633, %v1081
      %v1146 = vmul.f32 %v634, %v1082
      %v1147 = vmul.f32 %v635, %v1083
      %v1148 = vmul.f32 %v636, %v1084
      %v1149 = vmul.f32 %v637, %v1085
      %v1150 = vmul.f32 %v638, %v1086
      %v1151 = vmul.f32 %v639, %v1087
      %v1152 = vmul.f32 %v640, %v1088
      %v1153 = vmul.f32 %v641, %v1089
      %v1154 = vmul.f32 %v642, %v1090
      %v1155 = vmul.f32 %v643, %v1091
      %v1156 = vmul.f32 %v644, %v1092
      %v1157 = vmul.f32 %v645, %v1093
      %v1158 = vmul.f32 %v646, %v1094
      %v1159 = vmul.f32 %v647, %v1095
      %v1160 = vmul.f32 %v648, %v1096
      %v1161 = vmul.f32 %v649, %v1097
      %v1162 = vmul.f32 %v650, %v1098
      %v1163 = vmul.f32 %v651, %v1099
      %v1164 = vmul.f32 %v652, %v1100
      %v1165 = vmul.f32 %v653, %v1101
      %v1166 = vmul.f32 %v654, %v1102
      %v1167 = vmul.f32 %v655, %v1103
      %v1168 = vmul.f32 %v656, %v1104
      %v1169 = vmul.f32 %v657, %v1105
      %v1170 = vmul.f32 %v658, %v1106
      %v1171 = vmul.f32 %v659, %v1107
      %v1172 = vmul.f32 %v660, %v1108
      %v1173 = vmul.f32 %v661, %v1109
      %v1174 = vmul.f32 %v662, %v1110
      %v1175 = vmul.f32 %v663, %v1111
      %v1176 = vmul.f32 %v664, %v1112
      %v1177 = vmul.f32 %v665, %v1113
      %v1178 = vmul.f32 %v666, %v1114
      %v1179 = vmul.f32 %v667, %v1115
      %v1180 = vmul.f32 %v668, %v1116
      %v1181 = vmul.f32 %v669, %v1117
      %v1182 = vmul.f32 %v670, %v1118
      %v1183 = vmul.f32 %v671, %v1119
      %v1184 = vmul.f32 %v672, %v1120
      %v1185 = vmul.f32 %v673, %v1121
      %v1186 = vmul.f32 %v674, %v1122
      %v1187 = vmul.f32 %v675, %v1123
      %v1188 = vmul.f32 %v676, %v1124
      %v1189 = vmul.f32 %v677, %v1125
      %v1190 = vmul.f32 %v678, %v1126
      %v1191 = vld [vmem:[%s1] sm:$0x1]
      %v1193 = vlaneseq
      %v1194 = vshrl.u32 %v1193, 7
      %v1195 = vsub.s32 0, %v1194
      %v1196 = vrot.slane %v1191, %v1195
      %v1198 = vmul.f32 %v1127, %v1196
      %v1199 = vmul.f32 %v1128, %v1196
      %v1200 = vmul.f32 %v1129, %v1196
      %v1201 = vmul.f32 %v1130, %v1196
      %v1202 = vmul.f32 %v1131, %v1196
      %v1203 = vmul.f32 %v1132, %v1196
      %v1204 = vmul.f32 %v1133, %v1196
      %v1205 = vmul.f32 %v1134, %v1196
      %v1206 = vmul.f32 %v1135, %v1196
      %v1207 = vmul.f32 %v1136, %v1196
      %v1208 = vmul.f32 %v1137, %v1196
      %v1209 = vmul.f32 %v1138, %v1196
      %v1210 = vmul.f32 %v1139, %v1196
      %v1211 = vmul.f32 %v1140, %v1196
      %v1212 = vmul.f32 %v1141, %v1196
      %v1213 = vmul.f32 %v1142, %v1196
      %v1214 = vmul.f32 %v1143, %v1196
      %v1215 = vmul.f32 %v1144, %v1196
      %v1216 = vmul.f32 %v1145, %v1196
      %v1217 = vmul.f32 %v1146, %v1196
      %v1218 = vmul.f32 %v1147, %v1196
      %v1219 = vmul.f32 %v1148, %v1196
      %v1220 = vmul.f32 %v1149, %v1196
      %v1221 = vmul.f32 %v1150, %v1196
      %v1222 = vmul.f32 %v1151, %v1196
      %v1223 = vmul.f32 %v1152, %v1196
      %v1224 = vmul.f32 %v1153, %v1196
      %v1225 = vmul.f32 %v1154, %v1196
      %v1226 = vmul.f32 %v1155, %v1196
      %v1227 = vmul.f32 %v1156, %v1196
      %v1228 = vmul.f32 %v1157, %v1196
      %v1229 = vmul.f32 %v1158, %v1196
      %v1230 = vmul.f32 %v1159, %v1196
      %v1231 = vmul.f32 %v1160, %v1196
      %v1232 = vmul.f32 %v1161, %v1196
      %v1233 = vmul.f32 %v1162, %v1196
      %v1234 = vmul.f32 %v1163, %v1196
      %v1235 = vmul.f32 %v1164, %v1196
      %v1236 = vmul.f32 %v1165, %v1196
      %v1237 = vmul.f32 %v1166, %v1196
      %v1238 = vmul.f32 %v1167, %v1196
      %v1239 = vmul.f32 %v1168, %v1196
      %v1240 = vmul.f32 %v1169, %v1196
      %v1241 = vmul.f32 %v1170, %v1196
      %v1242 = vmul.f32 %v1171, %v1196
      %v1243 = vmul.f32 %v1172, %v1196
      %v1244 = vmul.f32 %v1173, %v1196
      %v1245 = vmul.f32 %v1174, %v1196
      %v1246 = vmul.f32 %v1175, %v1196
      %v1247 = vmul.f32 %v1176, %v1196
      %v1248 = vmul.f32 %v1177, %v1196
      %v1249 = vmul.f32 %v1178, %v1196
      %v1250 = vmul.f32 %v1179, %v1196
      %v1251 = vmul.f32 %v1180, %v1196
      %v1252 = vmul.f32 %v1181, %v1196
      %v1253 = vmul.f32 %v1182, %v1196
      %v1254 = vmul.f32 %v1183, %v1196
      %v1255 = vmul.f32 %v1184, %v1196
      %v1256 = vmul.f32 %v1185, %v1196
      %v1257 = vmul.f32 %v1186, %v1196
      %v1258 = vmul.f32 %v1187, %v1196
      %v1259 = vmul.f32 %v1188, %v1196
      %v1260 = vmul.f32 %v1189, %v1196
      %v1261 = vmul.f32 %v1190, %v1196
      %v1262 = vld [vmem:[%s2] sm:$0x1]
      %v1264 = vlaneseq
      %v1265 = vshrl.u32 %v1264, 7
      %v1266 = vsub.s32 0, %v1265
      %v1267 = vrot.slane %v1262, %v1266
      %v1269 = vadd.f32 %v1198, %v1267
      %v1270 = vadd.f32 %v1199, %v1267
      %v1271 = vadd.f32 %v1200, %v1267
      %v1272 = vadd.f32 %v1201, %v1267
      %v1273 = vadd.f32 %v1202, %v1267
      %v1274 = vadd.f32 %v1203, %v1267
      %v1275 = vadd.f32 %v1204, %v1267
      %v1276 = vadd.f32 %v1205, %v1267
      %v1277 = vadd.f32 %v1206, %v1267
      %v1278 = vadd.f32 %v1207, %v1267
      %v1279 = vadd.f32 %v1208, %v1267
      %v1280 = vadd.f32 %v1209, %v1267
      %v1281 = vadd.f32 %v1210, %v1267
      %v1282 = vadd.f32 %v1211, %v1267
      %v1283 = vadd.f32 %v1212, %v1267
      %v1284 = vadd.f32 %v1213, %v1267
      %v1285 = vadd.f32 %v1214, %v1267
      %v1286 = vadd.f32 %v1215, %v1267
      %v1287 = vadd.f32 %v1216, %v1267
      %v1288 = vadd.f32 %v1217, %v1267
      %v1289 = vadd.f32 %v1218, %v1267
      %v1290 = vadd.f32 %v1219, %v1267
      %v1291 = vadd.f32 %v1220, %v1267
      %v1292 = vadd.f32 %v1221, %v1267
      %v1293 = vadd.f32 %v1222, %v1267
      %v1294 = vadd.f32 %v1223, %v1267
      %v1295 = vadd.f32 %v1224, %v1267
      %v1296 = vadd.f32 %v1225, %v1267
      %v1297 = vadd.f32 %v1226, %v1267
      %v1298 = vadd.f32 %v1227, %v1267
      %v1299 = vadd.f32 %v1228, %v1267
      %v1300 = vadd.f32 %v1229, %v1267
      %v1301 = vadd.f32 %v1230, %v1267
      %v1302 = vadd.f32 %v1231, %v1267
      %v1303 = vadd.f32 %v1232, %v1267
      %v1304 = vadd.f32 %v1233, %v1267
      %v1305 = vadd.f32 %v1234, %v1267
      %v1306 = vadd.f32 %v1235, %v1267
      %v1307 = vadd.f32 %v1236, %v1267
      %v1308 = vadd.f32 %v1237, %v1267
      %v1309 = vadd.f32 %v1238, %v1267
      %v1310 = vadd.f32 %v1239, %v1267
      %v1311 = vadd.f32 %v1240, %v1267
      %v1312 = vadd.f32 %v1241, %v1267
      %v1313 = vadd.f32 %v1242, %v1267
      %v1314 = vadd.f32 %v1243, %v1267
      %v1315 = vadd.f32 %v1244, %v1267
      %v1316 = vadd.f32 %v1245, %v1267
      %v1317 = vadd.f32 %v1246, %v1267
      %v1318 = vadd.f32 %v1247, %v1267
      %v1319 = vadd.f32 %v1248, %v1267
      %v1320 = vadd.f32 %v1249, %v1267
      %v1321 = vadd.f32 %v1250, %v1267
      %v1322 = vadd.f32 %v1251, %v1267
      %v1323 = vadd.f32 %v1252, %v1267
      %v1324 = vadd.f32 %v1253, %v1267
      %v1325 = vadd.f32 %v1254, %v1267
      %v1326 = vadd.f32 %v1255, %v1267
      %v1327 = vadd.f32 %v1256, %v1267
      %v1328 = vadd.f32 %v1257, %v1267
      %v1329 = vadd.f32 %v1258, %v1267
      %v1330 = vadd.f32 %v1259, %v1267
      %v1331 = vadd.f32 %v1260, %v1267
      %v1332 = vadd.f32 %v1261, %v1267
      %v1333 = vpack.c.bf16 %v1270, %v1269
      %v1334 = vpack.c.bf16 %v1272, %v1271
      %v1335 = vpack.c.bf16 %v1274, %v1273
      %v1336 = vpack.c.bf16 %v1276, %v1275
      %v1337 = vpack.c.bf16 %v1278, %v1277
      %v1338 = vpack.c.bf16 %v1280, %v1279
      %v1339 = vpack.c.bf16 %v1282, %v1281
      %v1340 = vpack.c.bf16 %v1284, %v1283
      %v1341 = vpack.c.bf16 %v1286, %v1285
      %v1342 = vpack.c.bf16 %v1288, %v1287
      %v1343 = vpack.c.bf16 %v1290, %v1289
      %v1344 = vpack.c.bf16 %v1292, %v1291
      %v1345 = vpack.c.bf16 %v1294, %v1293
      %v1346 = vpack.c.bf16 %v1296, %v1295
      %v1347 = vpack.c.bf16 %v1298, %v1297
      %v1348 = vpack.c.bf16 %v1300, %v1299
      %v1349 = vpack.c.bf16 %v1302, %v1301
      %v1350 = vpack.c.bf16 %v1304, %v1303
      %v1351 = vpack.c.bf16 %v1306, %v1305
      %v1352 = vpack.c.bf16 %v1308, %v1307
      %v1353 = vpack.c.bf16 %v1310, %v1309
      %v1354 = vpack.c.bf16 %v1312, %v1311
      %v1355 = vpack.c.bf16 %v1314, %v1313
      %v1356 = vpack.c.bf16 %v1316, %v1315
      %v1357 = vpack.c.bf16 %v1318, %v1317
      %v1358 = vpack.c.bf16 %v1320, %v1319
      %v1359 = vpack.c.bf16 %v1322, %v1321
      %v1360 = vpack.c.bf16 %v1324, %v1323
      %v1361 = vpack.c.bf16 %v1326, %v1325
      %v1362 = vpack.c.bf16 %v1328, %v1327
      %v1363 = vpack.c.bf16 %v1330, %v1329
      %v1364 = vpack.c.bf16 %v1332, %v1331
      %v1365 = vld [vmem:[%s3] sm:$0xff]
      %v1366 = vld [vmem:[%s3 + $0x8] sm:$0xff]
      %v1367 = vld [vmem:[%s3 + $0x10] sm:$0xff]
      %v1368 = vld [vmem:[%s3 + $0x18] sm:$0xff]
      %v1369 = vpack.c.bf16 %v1366, %v1365
      %v1370 = vpack.c.bf16 %v1368, %v1367
      %v1371 = vld [vmem:[%s4] sm:$0x1]
      %v1373 = vlaneseq
      %v1374 = vshrl.u32 %v1373, 7
      %v1375 = vsub.s32 0, %v1374
      %v1376 = vrot.slane %v1371, %v1375
      %v1379 = vsel %vm357, %v1333, 0
      %v1382 = vsel %vm357, %v1334, 0
      %v1385 = vsel %vm357, %v1335, 0
      %v1388 = vsel %vm357, %v1336, 0
      %v1391 = vsel %vm357, %v1337, 0
      %v1394 = vsel %vm357, %v1338, 0
      %v1397 = vsel %vm357, %v1339, 0
      %v1400 = vsel %vm357, %v1340, 0
      %v1403 = vsel %vm357, %v1341, 0
      %v1406 = vsel %vm357, %v1342, 0
      %v1409 = vsel %vm357, %v1343, 0
      %v1412 = vsel %vm357, %v1344, 0
      %v1415 = vsel %vm357, %v1345, 0
      %v1418 = vsel %vm357, %v1346, 0
      %v1421 = vsel %vm357, %v1347, 0
      %v1424 = vsel %vm357, %v1348, 0
      %v1427 = vsel %vm357, %v1349, 0
      %v1430 = vsel %vm357, %v1350, 0
      %v1433 = vsel %vm357, %v1351, 0
      %v1436 = vsel %vm357, %v1352, 0
      %v1439 = vsel %vm357, %v1353, 0
      %v1442 = vsel %vm357, %v1354, 0
      %v1445 = vsel %vm357, %v1355, 0
      %v1448 = vsel %vm357, %v1356, 0
      %v1451 = vsel %vm357, %v1357, 0
      %v1454 = vsel %vm357, %v1358, 0
      %v1457 = vsel %vm357, %v1359, 0
      %v1460 = vsel %vm357, %v1360, 0
      %v1463 = vsel %vm357, %v1361, 0
      %v1466 = vsel %vm357, %v1362, 0
      %v1469 = vsel %vm357, %v1363, 0
      %v1472 = vsel %vm357, %v1364, 0
      %1474 = vmatprep.subr.bf16.mxu0 0
      %1475 = vmatpush1.bf16.msra.mxu0 0
      %1476 = vmatprep.subr.bf16.mxu0 0
      %1477 = vmatpush1.bf16.msra.mxu0 0
      %1478 = vmatprep.subr.bf16.mxu0 0
      %1479 = vmatpush1.bf16.msra.mxu0 0
      %1480 = vmatprep.subr.bf16.mxu0 0
      %1481 = vmatpush1.bf16.msra.mxu0 0
      %1482 = vmatprep.subr.bf16.mxu0 0
      %1483 = vmatpush1.bf16.msra.mxu0 0
      %1484 = vmatprep.subr.bf16.mxu0 0
      %1485 = vmatpush1.bf16.msra.mxu0 0
      %1486 = vmatprep.subr.bf16.mxu0 0
      %1487 = vmatpush1.bf16.msra.mxu0 %v1370
      %1488 = vmatprep.subr.bf16.mxu0 0
      %1489 = vmatpush1.bf16.msra.mxu0 %v1369
      %1490 = vmatprep.subr.bf16.mxu0 0
      %1491 = vmatpush2.bf16.msra.mxu0 0
      %1492 = vmatprep.subr.bf16.mxu0 0
      %1493 = vmatpush2.bf16.msra.mxu0 0
      %1494 = vmatprep.subr.bf16.mxu0 0
      %1495 = vmatpush2.bf16.msra.mxu0 0
      %1496 = vmatprep.subr.bf16.mxu0 0
      %1497 = vmatpush2.bf16.msra.mxu0 0
      %1498 = vmatprep.subr.bf16.mxu0 0
      %1499 = vmatpush2.bf16.msra.mxu0 0
      %1500 = vmatprep.subr.bf16.mxu0 0
      %1501 = vmatpush2.bf16.msra.mxu0 0
      %1502 = vmatprep.subr.bf16.mxu0 0
      %1503 = vmatpush2.bf16.msra.mxu0 0
      %1504 = vmatprep.subr.bf16.mxu0 0
      %1505 = vmatpush2.bf16.msra.mxu0 0
      %1506 = vmatprep.mubr.bf16.mxu0 0
      %1507 = vmatmul.mubr.bf16.gmra.mxu0 %v1379
      %v1508 = vpop.f32.mrf.mxu0
      %v1509 = vadd.f32 %v1376, %v1508
      %v1510 = vpop.f32.mrf.mxu0
      %v1511 = vpop.f32.mrf.mxu0
      %v1512 = vadd.f32 %v1376, %v1511
      %v1513 = vpop.f32.mrf.mxu0
      %1514 = vmatprep.mubr.bf16.mxu0 0
      %1515 = vmatmul.mubr.bf16.gmra.mxu0 %v1382
      %v1516 = vpop.f32.mrf.mxu0
      %v1517 = vadd.f32 %v1376, %v1516
      %v1518 = vpop.f32.mrf.mxu0
      %v1519 = vpop.f32.mrf.mxu0
      %v1520 = vadd.f32 %v1376, %v1519
      %v1521 = vpop.f32.mrf.mxu0
      %1522 = vmatprep.mubr.bf16.mxu0 0
      %1523 = vmatmul.mubr.bf16.gmra.mxu0 %v1385
      %v1524 = vpop.f32.mrf.mxu0
      %v1525 = vadd.f32 %v1376, %v1524
      %v1526 = vpop.f32.mrf.mxu0
      %v1527 = vpop.f32.mrf.mxu0
      %v1528 = vadd.f32 %v1376, %v1527
      %v1529 = vpop.f32.mrf.mxu0
      %1530 = vmatprep.mubr.bf16.mxu0 0
      %1531 = vmatmul.mubr.bf16.gmra.mxu0 %v1388
      %v1532 = vpop.f32.mrf.mxu0
      %v1533 = vadd.f32 %v1376, %v1532
      %v1534 = vpop.f32.mrf.mxu0
      %v1535 = vpop.f32.mrf.mxu0
      %v1536 = vadd.f32 %v1376, %v1535
      %v1537 = vpop.f32.mrf.mxu0
      %1538 = vmatprep.mubr.bf16.mxu0 0
      %1539 = vmatmul.mubr.bf16.gmra.mxu0 %v1391
      %v1540 = vpop.f32.mrf.mxu0
      %v1541 = vadd.f32 %v1376, %v1540
      %v1542 = vpop.f32.mrf.mxu0
      %v1543 = vpop.f32.mrf.mxu0
      %v1544 = vadd.f32 %v1376, %v1543
      %v1545 = vpop.f32.mrf.mxu0
      %1546 = vmatprep.mubr.bf16.mxu0 0
      %1547 = vmatmul.mubr.bf16.gmra.mxu0 %v1394
      %v1548 = vpop.f32.mrf.mxu0
      %v1549 = vadd.f32 %v1376, %v1548
      %v1550 = vpop.f32.mrf.mxu0
      %v1551 = vpop.f32.mrf.mxu0
      %v1552 = vadd.f32 %v1376, %v1551
      %v1553 = vpop.f32.mrf.mxu0
      %1554 = vmatprep.mubr.bf16.mxu0 0
      %1555 = vmatmul.mubr.bf16.gmra.mxu0 %v1397
      %v1556 = vpop.f32.mrf.mxu0
      %v1557 = vadd.f32 %v1376, %v1556
      %v1558 = vpop.f32.mrf.mxu0
      %v1559 = vpop.f32.mrf.mxu0
      %v1560 = vadd.f32 %v1376, %v1559
      %v1561 = vpop.f32.mrf.mxu0
      %1562 = vmatprep.mubr.bf16.mxu0 0
      %1563 = vmatmul.mubr.bf16.gmra.mxu0 %v1400
      %v1564 = vpop.f32.mrf.mxu0
      %v1565 = vadd.f32 %v1376, %v1564
      %v1566 = vpop.f32.mrf.mxu0
      %v1567 = vpop.f32.mrf.mxu0
      %v1568 = vadd.f32 %v1376, %v1567
      %v1569 = vpop.f32.mrf.mxu0
      %1570 = vmatprep.mubr.bf16.mxu0 0
      %1571 = vmatmul.mubr.bf16.gmra.mxu0 %v1403
      %v1572 = vpop.f32.mrf.mxu0
      %v1573 = vadd.f32 %v1376, %v1572
      %v1574 = vpop.f32.mrf.mxu0
      %v1575 = vpop.f32.mrf.mxu0
      %v1576 = vadd.f32 %v1376, %v1575
      %v1577 = vpop.f32.mrf.mxu0
      %1578 = vmatprep.mubr.bf16.mxu0 0
      %1579 = vmatmul.mubr.bf16.gmra.mxu0 %v1406
      %v1580 = vpop.f32.mrf.mxu0
      %v1581 = vadd.f32 %v1376, %v1580
      %v1582 = vpop.f32.mrf.mxu0
      %v1583 = vpop.f32.mrf.mxu0
      %v1584 = vadd.f32 %v1376, %v1583
      %v1585 = vpop.f32.mrf.mxu0
      %1586 = vmatprep.mubr.bf16.mxu0 0
      %1587 = vmatmul.mubr.bf16.gmra.mxu0 %v1409
      %v1588 = vpop.f32.mrf.mxu0
      %v1589 = vadd.f32 %v1376, %v1588
      %v1590 = vpop.f32.mrf.mxu0
      %v1591 = vpop.f32.mrf.mxu0
      %v1592 = vadd.f32 %v1376, %v1591
      %v1593 = vpop.f32.mrf.mxu0
      %1594 = vmatprep.mubr.bf16.mxu0 0
      %1595 = vmatmul.mubr.bf16.gmra.mxu0 %v1412
      %v1596 = vpop.f32.mrf.mxu0
      %v1597 = vadd.f32 %v1376, %v1596
      %v1598 = vpop.f32.mrf.mxu0
      %v1599 = vpop.f32.mrf.mxu0
      %v1600 = vadd.f32 %v1376, %v1599
      %v1601 = vpop.f32.mrf.mxu0
      %1602 = vmatprep.mubr.bf16.mxu0 0
      %1603 = vmatmul.mubr.bf16.gmra.mxu0 %v1415
      %v1604 = vpop.f32.mrf.mxu0
      %v1605 = vadd.f32 %v1376, %v1604
      %v1606 = vpop.f32.mrf.mxu0
      %v1607 = vpop.f32.mrf.mxu0
      %v1608 = vadd.f32 %v1376, %v1607
      %v1609 = vpop.f32.mrf.mxu0
      %1610 = vmatprep.mubr.bf16.mxu0 0
      %1611 = vmatmul.mubr.bf16.gmra.mxu0 %v1418
      %v1612 = vpop.f32.mrf.mxu0
      %v1613 = vadd.f32 %v1376, %v1612
      %v1614 = vpop.f32.mrf.mxu0
      %v1615 = vpop.f32.mrf.mxu0
      %v1616 = vadd.f32 %v1376, %v1615
      %v1617 = vpop.f32.mrf.mxu0
      %1618 = vmatprep.mubr.bf16.mxu0 0
      %1619 = vmatmul.mubr.bf16.gmra.mxu0 %v1421
      %v1620 = vpop.f32.mrf.mxu0
      %v1621 = vadd.f32 %v1376, %v1620
      %v1622 = vpop.f32.mrf.mxu0
      %v1623 = vpop.f32.mrf.mxu0
      %v1624 = vadd.f32 %v1376, %v1623
      %v1625 = vpop.f32.mrf.mxu0
      %1626 = vmatprep.mubr.bf16.mxu0 0
      %1627 = vmatmul.mubr.bf16.gmra.mxu0 %v1424
      %v1628 = vpop.f32.mrf.mxu0
      %v1629 = vadd.f32 %v1376, %v1628
      %v1630 = vpop.f32.mrf.mxu0
      %v1631 = vpop.f32.mrf.mxu0
      %v1632 = vadd.f32 %v1376, %v1631
      %v1633 = vpop.f32.mrf.mxu0
      %1634 = vmatprep.mubr.bf16.mxu0 0
      %1635 = vmatmul.mubr.bf16.gmra.mxu0 %v1427
      %v1636 = vpop.f32.mrf.mxu0
      %v1637 = vadd.f32 %v1376, %v1636
      %v1638 = vpop.f32.mrf.mxu0
      %v1639 = vpop.f32.mrf.mxu0
      %v1640 = vadd.f32 %v1376, %v1639
      %v1641 = vpop.f32.mrf.mxu0
      %1642 = vmatprep.mubr.bf16.mxu0 0
      %1643 = vmatmul.mubr.bf16.gmra.mxu0 %v1430
      %v1644 = vpop.f32.mrf.mxu0
      %v1645 = vadd.f32 %v1376, %v1644
      %v1646 = vpop.f32.mrf.mxu0
      %v1647 = vpop.f32.mrf.mxu0
      %v1648 = vadd.f32 %v1376, %v1647
      %v1649 = vpop.f32.mrf.mxu0
      %1650 = vmatprep.mubr.bf16.mxu0 0
      %1651 = vmatmul.mubr.bf16.gmra.mxu0 %v1433
      %v1652 = vpop.f32.mrf.mxu0
      %v1653 = vadd.f32 %v1376, %v1652
      %v1654 = vpop.f32.mrf.mxu0
      %v1655 = vpop.f32.mrf.mxu0
      %v1656 = vadd.f32 %v1376, %v1655
      %v1657 = vpop.f32.mrf.mxu0
      %1658 = vmatprep.mubr.bf16.mxu0 0
      %1659 = vmatmul.mubr.bf16.gmra.mxu0 %v1436
      %v1660 = vpop.f32.mrf.mxu0
      %v1661 = vadd.f32 %v1376, %v1660
      %v1662 = vpop.f32.mrf.mxu0
      %v1663 = vpop.f32.mrf.mxu0
      %v1664 = vadd.f32 %v1376, %v1663
      %v1665 = vpop.f32.mrf.mxu0
      %1666 = vmatprep.mubr.bf16.mxu0 0
      %1667 = vmatmul.mubr.bf16.gmra.mxu0 %v1439
      %v1668 = vpop.f32.mrf.mxu0
      %v1669 = vadd.f32 %v1376, %v1668
      %v1670 = vpop.f32.mrf.mxu0
      %v1671 = vpop.f32.mrf.mxu0
      %v1672 = vadd.f32 %v1376, %v1671
      %v1673 = vpop.f32.mrf.mxu0
      %1674 = vmatprep.mubr.bf16.mxu0 0
      %1675 = vmatmul.mubr.bf16.gmra.mxu0 %v1442
      %v1676 = vpop.f32.mrf.mxu0
      %v1677 = vadd.f32 %v1376, %v1676
      %v1678 = vpop.f32.mrf.mxu0
      %v1679 = vpop.f32.mrf.mxu0
      %v1680 = vadd.f32 %v1376, %v1679
      %v1681 = vpop.f32.mrf.mxu0
      %1682 = vmatprep.mubr.bf16.mxu0 0
      %1683 = vmatmul.mubr.bf16.gmra.mxu0 %v1445
      %v1684 = vpop.f32.mrf.mxu0
      %v1685 = vadd.f32 %v1376, %v1684
      %v1686 = vpop.f32.mrf.mxu0
      %v1687 = vpop.f32.mrf.mxu0
      %v1688 = vadd.f32 %v1376, %v1687
      %v1689 = vpop.f32.mrf.mxu0
      %1690 = vmatprep.mubr.bf16.mxu0 0
      %1691 = vmatmul.mubr.bf16.gmra.mxu0 %v1448
      %v1692 = vpop.f32.mrf.mxu0
      %v1693 = vadd.f32 %v1376, %v1692
      %v1694 = vpop.f32.mrf.mxu0
      %v1695 = vpop.f32.mrf.mxu0
      %v1696 = vadd.f32 %v1376, %v1695
      %v1697 = vpop.f32.mrf.mxu0
      %1698 = vmatprep.mubr.bf16.mxu0 0
      %1699 = vmatmul.mubr.bf16.gmra.mxu0 %v1451
      %v1700 = vpop.f32.mrf.mxu0
      %v1701 = vadd.f32 %v1376, %v1700
      %v1702 = vpop.f32.mrf.mxu0
      %v1703 = vpop.f32.mrf.mxu0
      %v1704 = vadd.f32 %v1376, %v1703
      %v1705 = vpop.f32.mrf.mxu0
      %1706 = vmatprep.mubr.bf16.mxu0 0
      %1707 = vmatmul.mubr.bf16.gmra.mxu0 %v1454
      %v1708 = vpop.f32.mrf.mxu0
      %v1709 = vadd.f32 %v1376, %v1708
      %v1710 = vpop.f32.mrf.mxu0
      %v1711 = vpop.f32.mrf.mxu0
      %v1712 = vadd.f32 %v1376, %v1711
      %v1713 = vpop.f32.mrf.mxu0
      %1714 = vmatprep.mubr.bf16.mxu0 0
      %1715 = vmatmul.mubr.bf16.gmra.mxu0 %v1457
      %v1716 = vpop.f32.mrf.mxu0
      %v1717 = vadd.f32 %v1376, %v1716
      %v1718 = vpop.f32.mrf.mxu0
      %v1719 = vpop.f32.mrf.mxu0
      %v1720 = vadd.f32 %v1376, %v1719
      %v1721 = vpop.f32.mrf.mxu0
      %1722 = vmatprep.mubr.bf16.mxu0 0
      %1723 = vmatmul.mubr.bf16.gmra.mxu0 %v1460
      %v1724 = vpop.f32.mrf.mxu0
      %v1725 = vadd.f32 %v1376, %v1724
      %v1726 = vpop.f32.mrf.mxu0
      %v1727 = vpop.f32.mrf.mxu0
      %v1728 = vadd.f32 %v1376, %v1727
      %v1729 = vpop.f32.mrf.mxu0
      %1730 = vmatprep.mubr.bf16.mxu0 0
      %1731 = vmatmul.mubr.bf16.gmra.mxu0 %v1463
      %v1732 = vpop.f32.mrf.mxu0
      %v1733 = vadd.f32 %v1376, %v1732
      %v1734 = vpop.f32.mrf.mxu0
      %v1735 = vpop.f32.mrf.mxu0
      %v1736 = vadd.f32 %v1376, %v1735
      %v1737 = vpop.f32.mrf.mxu0
      %1738 = vmatprep.mubr.bf16.mxu0 0
      %1739 = vmatmul.mubr.bf16.gmra.mxu0 %v1466
      %v1740 = vpop.f32.mrf.mxu0
      %v1741 = vadd.f32 %v1376, %v1740
      %v1742 = vpop.f32.mrf.mxu0
      %v1743 = vpop.f32.mrf.mxu0
      %v1744 = vadd.f32 %v1376, %v1743
      %v1745 = vpop.f32.mrf.mxu0
      %1746 = vmatprep.mubr.bf16.mxu0 0
      %1747 = vmatmul.mubr.bf16.gmra.mxu0 %v1469
      %v1748 = vpop.f32.mrf.mxu0
      %v1749 = vadd.f32 %v1376, %v1748
      %v1750 = vpop.f32.mrf.mxu0
      %v1751 = vpop.f32.mrf.mxu0
      %v1752 = vadd.f32 %v1376, %v1751
      %v1753 = vpop.f32.mrf.mxu0
      %1754 = vmatprep.mubr.bf16.mxu0 0
      %1755 = vmatmul.mubr.bf16.gmra.mxu0 %v1472
      %v1756 = vpop.f32.mrf.mxu0
      %v1757 = vadd.f32 %v1376, %v1756
      %v1758 = vpop.f32.mrf.mxu0
      %v1759 = vpop.f32.mrf.mxu0
      %v1760 = vadd.f32 %v1376, %v1759
      %v1761 = vpop.f32.mrf.mxu0
      %1762 = vdwg.mxu0
      %v1763 = vpack.c.bf16 %v1512, %v1509
      %v1764 = vpack.c.bf16 %v1520, %v1517
      %v1765 = vpack.c.bf16 %v1528, %v1525
      %v1766 = vpack.c.bf16 %v1536, %v1533
      %v1767 = vpack.c.bf16 %v1544, %v1541
      %v1768 = vpack.c.bf16 %v1552, %v1549
      %v1769 = vpack.c.bf16 %v1560, %v1557
      %v1770 = vpack.c.bf16 %v1568, %v1565
      %v1771 = vpack.c.bf16 %v1576, %v1573
      %v1772 = vpack.c.bf16 %v1584, %v1581
      %v1773 = vpack.c.bf16 %v1592, %v1589
      %v1774 = vpack.c.bf16 %v1600, %v1597
      %v1775 = vpack.c.bf16 %v1608, %v1605
      %v1776 = vpack.c.bf16 %v1616, %v1613
      %v1777 = vpack.c.bf16 %v1624, %v1621
      %v1778 = vpack.c.bf16 %v1632, %v1629
      %v1779 = vpack.c.bf16 %v1640, %v1637
      %v1780 = vpack.c.bf16 %v1648, %v1645
      %v1781 = vpack.c.bf16 %v1656, %v1653
      %v1782 = vpack.c.bf16 %v1664, %v1661
      %v1783 = vpack.c.bf16 %v1672, %v1669
      %v1784 = vpack.c.bf16 %v1680, %v1677
      %v1785 = vpack.c.bf16 %v1688, %v1685
      %v1786 = vpack.c.bf16 %v1696, %v1693
      %v1787 = vpack.c.bf16 %v1704, %v1701
      %v1788 = vpack.c.bf16 %v1712, %v1709
      %v1789 = vpack.c.bf16 %v1720, %v1717
      %v1790 = vpack.c.bf16 %v1728, %v1725
      %v1791 = vpack.c.bf16 %v1736, %v1733
      %v1792 = vpack.c.bf16 %v1744, %v1741
      %v1793 = vpack.c.bf16 %v1752, %v1749
      %v1794 = vpack.c.bf16 %v1760, %v1757
      %v1827 = vunpack.c.l.b16 %v1763
      %v1828 = vunpack.c.h.b16 %v1763
      %v1829 = vunpack.c.l.b16 %v1764
      %v1830 = vunpack.c.h.b16 %v1764
      %v1831 = vunpack.c.l.b16 %v1765
      %v1832 = vunpack.c.h.b16 %v1765
      %v1833 = vunpack.c.l.b16 %v1766
      %v1834 = vunpack.c.h.b16 %v1766
      %v1835 = vunpack.c.l.b16 %v1767
      %v1836 = vunpack.c.h.b16 %v1767
      %v1837 = vunpack.c.l.b16 %v1768
      %v1838 = vunpack.c.h.b16 %v1768
      %v1839 = vunpack.c.l.b16 %v1769
      %v1840 = vunpack.c.h.b16 %v1769
      %v1841 = vunpack.c.l.b16 %v1770
      %v1842 = vunpack.c.h.b16 %v1770
      %v1843 = vunpack.c.l.b16 %v1771
      %v1844 = vunpack.c.h.b16 %v1771
      %v1845 = vunpack.c.l.b16 %v1772
      %v1846 = vunpack.c.h.b16 %v1772
      %v1847 = vunpack.c.l.b16 %v1773
      %v1848 = vunpack.c.h.b16 %v1773
      %v1849 = vunpack.c.l.b16 %v1774
      %v1850 = vunpack.c.h.b16 %v1774
      %v1851 = vunpack.c.l.b16 %v1775
      %v1852 = vunpack.c.h.b16 %v1775
      %v1853 = vunpack.c.l.b16 %v1776
      %v1854 = vunpack.c.h.b16 %v1776
      %v1855 = vunpack.c.l.b16 %v1777
      %v1856 = vunpack.c.h.b16 %v1777
      %v1857 = vunpack.c.l.b16 %v1778
      %v1858 = vunpack.c.h.b16 %v1778
      %v1859 = vunpack.c.l.b16 %v1779
      %v1860 = vunpack.c.h.b16 %v1779
      %v1861 = vunpack.c.l.b16 %v1780
      %v1862 = vunpack.c.h.b16 %v1780
      %v1863 = vunpack.c.l.b16 %v1781
      %v1864 = vunpack.c.h.b16 %v1781
      %v1865 = vunpack.c.l.b16 %v1782
      %v1866 = vunpack.c.h.b16 %v1782
      %v1867 = vunpack.c.l.b16 %v1783
      %v1868 = vunpack.c.h.b16 %v1783
      %v1869 = vunpack.c.l.b16 %v1784
      %v1870 = vunpack.c.h.b16 %v1784
      %v1871 = vunpack.c.l.b16 %v1785
      %v1872 = vunpack.c.h.b16 %v1785
      %v1873 = vunpack.c.l.b16 %v1786
      %v1874 = vunpack.c.h.b16 %v1786
      %v1875 = vunpack.c.l.b16 %v1787
      %v1876 = vunpack.c.h.b16 %v1787
      %v1877 = vunpack.c.l.b16 %v1788
      %v1878 = vunpack.c.h.b16 %v1788
      %v1879 = vunpack.c.l.b16 %v1789
      %v1880 = vunpack.c.h.b16 %v1789
      %v1881 = vunpack.c.l.b16 %v1790
      %v1882 = vunpack.c.h.b16 %v1790
      %v1883 = vunpack.c.l.b16 %v1791
      %v1884 = vunpack.c.h.b16 %v1791
      %v1885 = vunpack.c.l.b16 %v1792
      %v1886 = vunpack.c.h.b16 %v1792
      %v1887 = vunpack.c.l.b16 %v1793
      %v1888 = vunpack.c.h.b16 %v1793
      %v1889 = vunpack.c.l.b16 %v1794
      %v1890 = vunpack.c.h.b16 %v1794
      %v1891 = vpack.c.b16 %v1827, %v1827
      %v1892 = vpack.c.b16 %v1828, %v1828
      %v1893 = vpack.c.b16 %v1829, %v1829
      %v1894 = vpack.c.b16 %v1830, %v1830
      %v1895 = vpack.c.b16 %v1831, %v1831
      %v1896 = vpack.c.b16 %v1832, %v1832
      %v1897 = vpack.c.b16 %v1833, %v1833
      %v1898 = vpack.c.b16 %v1834, %v1834
      %v1899 = vpack.c.b16 %v1835, %v1835
      %v1900 = vpack.c.b16 %v1836, %v1836
      %v1901 = vpack.c.b16 %v1837, %v1837
      %v1902 = vpack.c.b16 %v1838, %v1838
      %v1903 = vpack.c.b16 %v1839, %v1839
      %v1904 = vpack.c.b16 %v1840, %v1840
      %v1905 = vpack.c.b16 %v1841, %v1841
      %v1906 = vpack.c.b16 %v1842, %v1842
      %v1907 = vpack.c.b16 %v1843, %v1843
      %v1908 = vpack.c.b16 %v1844, %v1844
      %v1909 = vpack.c.b16 %v1845, %v1845
      %v1910 = vpack.c.b16 %v1846, %v1846
      %v1911 = vpack.c.b16 %v1847, %v1847
      %v1912 = vpack.c.b16 %v1848, %v1848
      %v1913 = vpack.c.b16 %v1849, %v1849
      %v1914 = vpack.c.b16 %v1850, %v1850
      %v1915 = vpack.c.b16 %v1851, %v1851
      %v1916 = vpack.c.b16 %v1852, %v1852
      %v1917 = vpack.c.b16 %v1853, %v1853
      %v1918 = vpack.c.b16 %v1854, %v1854
      %v1919 = vpack.c.b16 %v1855, %v1855
      %v1920 = vpack.c.b16 %v1856, %v1856
      %v1921 = vpack.c.b16 %v1857, %v1857
      %v1922 = vpack.c.b16 %v1858, %v1858
      %v1923 = vpack.c.b16 %v1859, %v1859
      %v1924 = vpack.c.b16 %v1860, %v1860
      %v1925 = vpack.c.b16 %v1861, %v1861
      %v1926 = vpack.c.b16 %v1862, %v1862
      %v1927 = vpack.c.b16 %v1863, %v1863
      %v1928 = vpack.c.b16 %v1864, %v1864
      %v1929 = vpack.c.b16 %v1865, %v1865
      %v1930 = vpack.c.b16 %v1866, %v1866
      %v1931 = vpack.c.b16 %v1867, %v1867
      %v1932 = vpack.c.b16 %v1868, %v1868
      %v1933 = vpack.c.b16 %v1869, %v1869
      %v1934 = vpack.c.b16 %v1870, %v1870
      %v1935 = vpack.c.b16 %v1871, %v1871
      %v1936 = vpack.c.b16 %v1872, %v1872
      %v1937 = vpack.c.b16 %v1873, %v1873
      %v1938 = vpack.c.b16 %v1874, %v1874
      %v1939 = vpack.c.b16 %v1875, %v1875
      %v1940 = vpack.c.b16 %v1876, %v1876
      %v1941 = vpack.c.b16 %v1877, %v1877
      %v1942 = vpack.c.b16 %v1878, %v1878
      %v1943 = vpack.c.b16 %v1879, %v1879
      %v1944 = vpack.c.b16 %v1880, %v1880
      %v1945 = vpack.c.b16 %v1881, %v1881
      %v1946 = vpack.c.b16 %v1882, %v1882
      %v1947 = vpack.c.b16 %v1883, %v1883
      %v1948 = vpack.c.b16 %v1884, %v1884
      %v1949 = vpack.c.b16 %v1885, %v1885
      %v1950 = vpack.c.b16 %v1886, %v1886
      %v1951 = vpack.c.b16 %v1887, %v1887
      %v1952 = vpack.c.b16 %v1888, %v1888
      %v1953 = vpack.c.b16 %v1889, %v1889
      %v1954 = vpack.c.b16 %v1890, %v1890
      %vm2019 = vcmask 322560
      %2020 = vst.msk [vmem:[%s226] sm:$0xf] %vm2019, %v1891
      %2021 = vst.msk [vmem:[%s226 + $0x4] sm:$0xf] %vm2019, %v1892
      %2022 = vst.msk [vmem:[%s226 + $0x8] sm:$0xf] %vm2019, %v1893
      %2023 = vst.msk [vmem:[%s226 + $0xc] sm:$0xf] %vm2019, %v1894
      %2024 = vst.msk [vmem:[%s226 + $0x10] sm:$0xf] %vm2019, %v1895
      %2025 = vst.msk [vmem:[%s226 + $0x14] sm:$0xf] %vm2019, %v1896
      %2026 = vst.msk [vmem:[%s226 + $0x18] sm:$0xf] %vm2019, %v1897
      %2027 = vst.msk [vmem:[%s226 + $0x1c] sm:$0xf] %vm2019, %v1898
      %2028 = vst.msk [vmem:[%s226 + $0x20] sm:$0xf] %vm2019, %v1899
      %2029 = vst.msk [vmem:[%s226 + $0x24] sm:$0xf] %vm2019, %v1900
      %2030 = vst.msk [vmem:[%s226 + $0x28] sm:$0xf] %vm2019, %v1901
      %2031 = vst.msk [vmem:[%s226 + $0x2c] sm:$0xf] %vm2019, %v1902
      %2032 = vst.msk [vmem:[%s226 + $0x30] sm:$0xf] %vm2019, %v1903
      %2033 = vst.msk [vmem:[%s226 + $0x34] sm:$0xf] %vm2019, %v1904
      %2034 = vst.msk [vmem:[%s226 + $0x38] sm:$0xf] %vm2019, %v1905
      %2035 = vst.msk [vmem:[%s226 + $0x3c] sm:$0xf] %vm2019, %v1906
      %2036 = vst.msk [vmem:[%s226 + $0x40] sm:$0xf] %vm2019, %v1907
      %2037 = vst.msk [vmem:[%s226 + $0x44] sm:$0xf] %vm2019, %v1908
      %2038 = vst.msk [vmem:[%s226 + $0x48] sm:$0xf] %vm2019, %v1909
      %2039 = vst.msk [vmem:[%s226 + $0x4c] sm:$0xf] %vm2019, %v1910
      %2040 = vst.msk [vmem:[%s226 + $0x50] sm:$0xf] %vm2019, %v1911
      %2041 = vst.msk [vmem:[%s226 + $0x54] sm:$0xf] %vm2019, %v1912
      %2042 = vst.msk [vmem:[%s226 + $0x58] sm:$0xf] %vm2019, %v1913
      %2043 = vst.msk [vmem:[%s226 + $0x5c] sm:$0xf] %vm2019, %v1914
      %2044 = vst.msk [vmem:[%s226 + $0x60] sm:$0xf] %vm2019, %v1915
      %2045 = vst.msk [vmem:[%s226 + $0x64] sm:$0xf] %vm2019, %v1916
      %2046 = vst.msk [vmem:[%s226 + $0x68] sm:$0xf] %vm2019, %v1917
      %2047 = vst.msk [vmem:[%s226 + $0x6c] sm:$0xf] %vm2019, %v1918
      %2048 = vst.msk [vmem:[%s226 + $0x70] sm:$0xf] %vm2019, %v1919
      %2049 = vst.msk [vmem:[%s226 + $0x74] sm:$0xf] %vm2019, %v1920
      %2050 = vst.msk [vmem:[%s226 + $0x78] sm:$0xf] %vm2019, %v1921
      %2051 = vst.msk [vmem:[%s226 + $0x7c] sm:$0xf] %vm2019, %v1922
      %2052 = vst.msk [vmem:[%s226 + $0x80] sm:$0xf] %vm2019, %v1923
      %2053 = vst.msk [vmem:[%s226 + $0x84] sm:$0xf] %vm2019, %v1924
      %2054 = vst.msk [vmem:[%s226 + $0x88] sm:$0xf] %vm2019, %v1925
      %2055 = vst.msk [vmem:[%s226 + $0x8c] sm:$0xf] %vm2019, %v1926
      %2056 = vst.msk [vmem:[%s226 + $0x90] sm:$0xf] %vm2019, %v1927
      %2057 = vst.msk [vmem:[%s226 + $0x94] sm:$0xf] %vm2019, %v1928
      %2058 = vst.msk [vmem:[%s226 + $0x98] sm:$0xf] %vm2019, %v1929
      %2059 = vst.msk [vmem:[%s226 + $0x9c] sm:$0xf] %vm2019, %v1930
      %2060 = vst.msk [vmem:[%s226 + $0xa0] sm:$0xf] %vm2019, %v1931
      %2061 = vst.msk [vmem:[%s226 + $0xa4] sm:$0xf] %vm2019, %v1932
      %2062 = vst.msk [vmem:[%s226 + $0xa8] sm:$0xf] %vm2019, %v1933
      %2063 = vst.msk [vmem:[%s226 + $0xac] sm:$0xf] %vm2019, %v1934
      %2064 = vst.msk [vmem:[%s226 + $0xb0] sm:$0xf] %vm2019, %v1935
      %2065 = vst.msk [vmem:[%s226 + $0xb4] sm:$0xf] %vm2019, %v1936
      %2066 = vst.msk [vmem:[%s226 + $0xb8] sm:$0xf] %vm2019, %v1937
      %2067 = vst.msk [vmem:[%s226 + $0xbc] sm:$0xf] %vm2019, %v1938
      %2068 = vst.msk [vmem:[%s226 + $0xc0] sm:$0xf] %vm2019, %v1939
      %2069 = vst.msk [vmem:[%s226 + $0xc4] sm:$0xf] %vm2019, %v1940
      %2070 = vst.msk [vmem:[%s226 + $0xc8] sm:$0xf] %vm2019, %v1941
      %2071 = vst.msk [vmem:[%s226 + $0xcc] sm:$0xf] %vm2019, %v1942
      %2072 = vst.msk [vmem:[%s226 + $0xd0] sm:$0xf] %vm2019, %v1943
      %2073 = vst.msk [vmem:[%s226 + $0xd4] sm:$0xf] %vm2019, %v1944
      %2074 = vst.msk [vmem:[%s226 + $0xd8] sm:$0xf] %vm2019, %v1945
      %2075 = vst.msk [vmem:[%s226 + $0xdc] sm:$0xf] %vm2019, %v1946
      %2076 = vst.msk [vmem:[%s226 + $0xe0] sm:$0xf] %vm2019, %v1947
      %2077 = vst.msk [vmem:[%s226 + $0xe4] sm:$0xf] %vm2019, %v1948
      %2078 = vst.msk [vmem:[%s226 + $0xe8] sm:$0xf] %vm2019, %v1949
      %2079 = vst.msk [vmem:[%s226 + $0xec] sm:$0xf] %vm2019, %v1950
      %2080 = vst.msk [vmem:[%s226 + $0xf0] sm:$0xf] %vm2019, %v1951
      %2081 = vst.msk [vmem:[%s226 + $0xf4] sm:$0xf] %vm2019, %v1952
      %2082 = vst.msk [vmem:[%s226 + $0xf8] sm:$0xf] %vm2019, %v1953
      %2083 = vst.msk [vmem:[%s226 + $0xfc] sm:$0xf] %vm2019, %v1954
      %s2084 = smul.u32 64, %s16
      %p2085 = scmp.lt.s32.totalorder %s2084, 127
      %s2086 = scalar_select %p2085, %s2084, 127
      %s2087 = smul.addr %s2086, 4
      %s2088 = scalar_lea.vmem %s5, %s2087
      // Predicated region
      $region41: #{tpu_custom_call.1} parent=39 // pred_check
        %p2089 = pneg %p144
      $region42: #{tpu_custom_call.1} parent=39 // pred_check_branch
        %2091 = sbr.rel (%p2089) target = $region44
      $region43: #{tpu_custom_call.1} parent=39 // pred_region
        %s2092 = smul.u32 64, %s16
      $region44: #{tpu_custom_call.1} parent=39 // pred_fallthru
        _
    $region40: #{tpu_custom_call.1} parent=5 // pred_fallthru
      _
    %p2093 = scmp.le.s32.totalorder 2, %s11
    // Predicated region
    $region45: #{tpu_custom_call.1} parent=5 // pred_check
      %p2094 = pneg %p2093
    $region46: #{tpu_custom_call.1} parent=5 // pred_check_branch
      %2096 = sbr.rel (%p2094) target = $region48
    $region47: #{tpu_custom_call.1} parent=5 // pred_region
      %s2097 = ssub.s32 %s11, 2
      // Predicated region
      $region49: #{tpu_custom_call.1} parent=47 // pred_check
        %p2098 = pneg %p150
      $region50: #{tpu_custom_call.1} parent=47 // pred_check_branch
        %2100 = sbr.rel (%p2098) target = $region52
      $region51: #{tpu_custom_call.1} parent=47 // pred_region
        %s2101 = smul.u32 64, %s17
        %p2102 = scmp.lt.s32.totalorder %s2101, 127
        %s2103 = scalar_select %p2102, %s2101, 127
        %s2104 = smul.addr %s2103, 4
        %s2105 = scalar_lea.vmem %s5, %s2104
      $region52: #{tpu_custom_call.1} parent=47 // pred_fallthru
        _
    $region48: #{tpu_custom_call.1} parent=5 // pred_fallthru
      _
  $region6: #{tpu_custom_call.1} parent=0 // loop_footer
    %s15 = sadd.s32 1, %s11
  $region7: #{tpu_custom_call.1} parent=0 // loop_footer_branch
    %10 = sbr.rel target = $region3
  $region8: #{tpu_custom_call.1} parent=0 // loop_exit
    _

</llo_original>
